<compile_context>
chip_gen: v6e
topology: v6e:2x2x1
jax: 0.10.0
libtpu: 0.0.40
codegen_flags: <defaults>
</compile_context>

<pallas_src>
import math

import jax
import jax.numpy as jnp
from jax import lax
from jax.experimental import pallas as pl
from jax.experimental.pallas import tpu as pltpu


# ---------------------------------------------------------------------------
# In-kernel helpers (all statistics / elementwise math in f32)
# ---------------------------------------------------------------------------
def _layernorm(x, gamma, beta, eps=1e-5):
    mean = jnp.mean(x, axis=-1, keepdims=True)
    var = jnp.mean(jnp.square(x - mean), axis=-1, keepdims=True)
    return (x - mean) * lax.rsqrt(var + eps) * gamma + beta


def _softmax_rows(s):
    # s: (rows, cols) f32 — row softmax with the reciprocal on the EUP slot.
    m = jnp.max(s, axis=-1, keepdims=True)
    e = jnp.exp(s - m)
    return e * pl.reciprocal(jnp.sum(e, axis=-1, keepdims=True), approx=True)


def _mha(x_q, x_k, x_v, w, num_heads, cd):
    """Multi-head attention on one batch element.

    x_q/x_k/x_v: (S, D) f32.  w = (wq, bq, wk, bk, wv, bv, wo, bo) with
    wq/wk/wv head-stacked as (D, H*dk)/(D, H*dv) and wo as (H, dv, D).
    """
    wq, bq, wk, bk, wv, bv, wo, bo = w
    hk = wq.shape[1]
    dk = hk // num_heads
    hv = wv.shape[1]
    dv = hv // num_heads
    inv_scale = 1.0 / math.sqrt(dk)

    # Fused full-width projections: one GEMM each instead of H per-head GEMMs.
    q = jnp.dot(x_q.astype(cd), wq.astype(cd), preferred_element_type=jnp.float32) + bq
    k = jnp.dot(x_k.astype(cd), wk.astype(cd), preferred_element_type=jnp.float32) + bk
    v = jnp.dot(x_v.astype(cd), wv.astype(cd), preferred_element_type=jnp.float32) + bv
    q = q * inv_scale                      # fold 1/sqrt(dk) into Q, not the SxS scores

    qc = q.astype(cd)
    kc = k.astype(cd)
    vc = v.astype(cd)
    woc = wo.astype(cd)

    s_rows = x_q.shape[0]
    d_out = wo.shape[-1]
    out = jnp.zeros((s_rows, d_out), jnp.float32)

    # Scores / context are inherently per-head: slice the fused Q/K/V along
    # lanes (static, lane-aligned) and accumulate the output projection per
    # head into a single (S, D) accumulator (no concatenate / relayout).
    for h in range(num_heads):
        qh = qc[:, h * dk:(h + 1) * dk]
        kh = kc[:, h * dk:(h + 1) * dk]
        vh = vc[:, h * dv:(h + 1) * dv]
        s = lax.dot_general(qh, kh, (((1,), (1,)), ((), ())),
                            preferred_element_type=jnp.float32)           # (S, S)
        p = _softmax_rows(s)
        ctx = jnp.dot(p.astype(cd), vh, preferred_element_type=jnp.float32)  # (S, dv)
        out = out + jnp.dot(ctx.astype(cd), woc[h],
                            preferred_element_type=jnp.float32)
    return out + bo


def _ff(x, w1, b1, w2, b2, cd):
    h = jnp.dot(x.astype(cd), w1.astype(cd), preferred_element_type=jnp.float32) + b1
    h = jnp.maximum(h, 0.0)                                                # ReLU
    return jnp.dot(h.astype(cd), w2.astype(cd), preferred_element_type=jnp.float32) + b2


# ---------------------------------------------------------------------------
# Fused layer kernels (one batch element per grid step)
# ---------------------------------------------------------------------------
def _make_encoder_kernel(num_heads, cd):
    def kernel(x_ref, *rest):
        o_ref = rest[-1]
        vals = [r[...] for r in rest[:-1]]
        (wq, bq, wk, bk, wv, bv, wo, bo, g1, be1,
         w1, b1, w2, b2, g2, be2) = vals
        x = x_ref[0]                                                       # (S, D)
        a = _mha(x, x, x, (wq, bq, wk, bk, wv, bv, wo, bo), num_heads, cd)
        x = _layernorm(x + a, g1, be1)       # Residual(MHA): dropout = identity
        f = _ff(x, w1, b1, w2, b2, cd)
        o_ref[0] = _layernorm(x + f, g2, be2)
    return kernel


def _make_decoder_kernel(num_heads, cd):
    def kernel(tgt_ref, mem_ref, *rest):
        o_ref = rest[-1]
        vals = [r[...] for r in rest[:-1]]
        a1, a2, ffp = vals[0:10], vals[10:20], vals[20:26]
        t = tgt_ref[0]                                                     # (S, D)
        m = mem_ref[0]                                                     # (Sm, D)
        # attention_1: LN(t + MHA(t, t, t))
        t = _layernorm(t + _mha(t, t, t, tuple(a1[:8]), num_heads, cd), a1[8], a1[9])
        # attention_2: LN(t + MHA(q=memory, k=memory, v=t))  (matches the module)
        t = _layernorm(t + _mha(m, m, t, tuple(a2[:8]), num_heads, cd), a2[8], a2[9])
        # feed_forward: LN(t + FF(t))
        f = _ff(t, ffp[0], ffp[1], ffp[2], ffp[3], cd)
        o_ref[0] = _layernorm(t + f, ffp[4], ffp[5])
    return kernel


def _make_head_kernel(cd):
    def kernel(x_ref, w_ref, b_ref, o_ref):
        x = x_ref[0]
        logits = jnp.dot(x.astype(cd), w_ref[...].astype(cd),
                         preferred_element_type=jnp.float32) + b_ref[...]
        o_ref[0] = _softmax_rows(logits)
    return kernel


# ---------------------------------------------------------------------------
# pallas_call wrappers
# ---------------------------------------------------------------------------
def _const_spec(arr):
    # Full-array block, constant index map: block index never changes across
    # the grid, so the weights stay VMEM-resident (no re-DMA per grid step).
    nd = arr.ndim
    return pl.BlockSpec(arr.shape, lambda i, _nd=nd: (0,) * _nd)


def _attn_weight_list(p):
    return [p["wq"], p["bq"], p["wk"], p["bk"], p["wv"], p["bv"],
            p["wo"], p["bo"], p["g"], p["b"]]


def _ff_weight_list(p):
    return [p["w1"], p["b1"], p["w2"], p["b2"], p["g"], p["b"]]


def encoder_layer(src, p, *, num_heads, compute_dtype=jnp.bfloat16):
    B, S, D = src.shape
    seq_spec = pl.BlockSpec((1, S, D), lambda i: (i, 0, 0))
    weights = _attn_weight_list(p["attn"]) + _ff_weight_list(p["ff"])
    return pl.pallas_call(
        _make_encoder_kernel(num_heads, compute_dtype),
        out_shape=jax.ShapeDtypeStruct((B, S, D), jnp.float32),
        grid=(B,),
        in_specs=[seq_spec] + [_const_spec(w) for w in weights],
        out_specs=seq_spec,
        compiler_params=pltpu.CompilerParams(dimension_semantics=("parallel",)),
    )(src, *weights)


def decoder_layer(tgt, memory, p, *, num_heads, compute_dtype=jnp.bfloat16):
    B, St, D = tgt.shape
    _, Sm, _ = memory.shape
    tgt_spec = pl.BlockSpec((1, St, D), lambda i: (i, 0, 0))
    mem_spec = pl.BlockSpec((1, Sm, D), lambda i: (i, 0, 0))
    weights = (_attn_weight_list(p["attn1"]) + _attn_weight_list(p["attn2"])
               + _ff_weight_list(p["ff"]))
    return pl.pallas_call(
        _make_decoder_kernel(num_heads, compute_dtype),
        out_shape=jax.ShapeDtypeStruct((B, St, D), jnp.float32),
        grid=(B,),
        in_specs=[tgt_spec, mem_spec] + [_const_spec(w) for w in weights],
        out_specs=tgt_spec,
        compiler_params=pltpu.CompilerParams(dimension_semantics=("parallel",)),
    )(tgt, memory, *weights)


def decoder_head(x, w, b, *, compute_dtype=jnp.bfloat16):
    B, S, D = x.shape
    seq_spec = pl.BlockSpec((1, S, D), lambda i: (i, 0, 0))
    return pl.pallas_call(
        _make_head_kernel(compute_dtype),
        out_shape=jax.ShapeDtypeStruct((B, S, D), jnp.float32),
        grid=(B,),
        in_specs=[seq_spec, _const_spec(w), _const_spec(b)],
        out_specs=seq_spec,
        compiler_params=pltpu.CompilerParams(dimension_semantics=("parallel",)),
    )(x, w, b)


def position_encoding(seq_len, dim_model):
    # Constant table, computed in plain JAX (outside the kernels).
    pos = jnp.arange(seq_len, dtype=jnp.float32).reshape(1, -1, 1)
    dim = jnp.arange(dim_model, dtype=jnp.float32).reshape(1, 1, -1)
    phase = pos / jnp.power(10000.0, dim / dim_model)
    even = (jnp.arange(dim_model).reshape(1, 1, -1) % 2) == 0
    return jnp.where(even, jnp.sin(phase), jnp.cos(phase))


def transformer_forward(src, tgt, params, *, num_heads, compute_dtype=jnp.bfloat16):
    # Encoder
    src = src + position_encoding(src.shape[1], src.shape[2])
    for lp in params["encoder"]:
        src = encoder_layer(src, lp, num_heads=num_heads, compute_dtype=compute_dtype)
    memory = src
    # Decoder
    tgt = tgt + position_encoding(tgt.shape[1], tgt.shape[2])
    for lp in params["decoder"]:
        tgt = decoder_layer(tgt, memory, lp, num_heads=num_heads,
                            compute_dtype=compute_dtype)
    return decoder_head(tgt, params["out_w"], params["out_b"],
                        compute_dtype=compute_dtype)


# ---------------------------------------------------------------------------
# Pure-JAX f32 reference (mirrors the PyTorch module; dropout = identity)
# ---------------------------------------------------------------------------
def _ln_ref(x, g, b, eps=1e-5):
    mean = jnp.mean(x, axis=-1, keepdims=True)
    var = jnp.mean((x - mean) ** 2, axis=-1, keepdims=True)
    return (x - mean) / jnp.sqrt(var + eps) * g + b


def _mha_ref(q, k, v, p, num_heads):
    hk = p["wq"].shape[1]
    dk = hk // num_heads
    hv = p["wv"].shape[1]
    dv = hv // num_heads
    Q = q @ p["wq"] + p["bq"]
    K = k @ p["wk"] + p["bk"]
    V = v @ p["wv"] + p["bv"]
    outs = []
    for h in range(num_heads):
        Qh = Q[..., h * dk:(h + 1) * dk]
        Kh = K[..., h * dk:(h + 1) * dk]
        Vh = V[..., h * dv:(h + 1) * dv]
        s = jnp.einsum("bqd,bkd->bqk", Qh, Kh) / (dk ** 0.5)
        outs.append(jnp.einsum("bqk,bkd->bqd", jax.nn.softmax(s, axis=-1), Vh))
    cat = jnp.concatenate(outs, axis=-1)
    return cat @ p["wo"].reshape(hv, -1) + p["bo"]


def _encoder_layer_ref(x, p, num_heads):
    x = _ln_ref(x + _mha_ref(x, x, x, p["attn"], num_heads), p["attn"]["g"], p["attn"]["b"])
    f = jnp.maximum(x @ p["ff"]["w1"] + p["ff"]["b1"], 0.0) @ p["ff"]["w2"] + p["ff"]["b2"]
    return _ln_ref(x + f, p["ff"]["g"], p["ff"]["b"])


def _decoder_layer_ref(t, m, p, num_heads):
    t = _ln_ref(t + _mha_ref(t, t, t, p["attn1"], num_heads), p["attn1"]["g"], p["attn1"]["b"])
    t = _ln_ref(t + _mha_ref(m, m, t, p["attn2"], num_heads), p["attn2"]["g"], p["attn2"]["b"])
    f = jnp.maximum(t @ p["ff"]["w1"] + p["ff"]["b1"], 0.0) @ p["ff"]["w2"] + p["ff"]["b2"]
    return _ln_ref(t + f, p["ff"]["g"], p["ff"]["b"])


def transformer_ref(src, tgt, params, num_heads):
    src = src + position_encoding(src.shape[1], src.shape[2])
    for lp in params["encoder"]:
        src = _encoder_layer_ref(src, lp, num_heads)
    memory = src
    tgt = tgt + position_encoding(tgt.shape[1], tgt.shape[2])
    for lp in params["decoder"]:
        tgt = _decoder_layer_ref(tgt, memory, lp, num_heads)
    logits = tgt @ params["out_w"] + params["out_b"]
    return jax.nn.softmax(logits, axis=-1)


# ---------------------------------------------------------------------------
# Deterministic parameter init (PyTorch-Linear-style uniform bounds)
# ---------------------------------------------------------------------------
def _init_linear(key, fan_in, fan_out):
    kw, kb = jax.random.split(key)
    bound = 1.0 / math.sqrt(fan_in)
    w = jax.random.uniform(kw, (fan_in, fan_out), jnp.float32, -bound, bound)
    b = jax.random.uniform(kb, (fan_out,), jnp.float32, -bound, bound)
    return w, b


def _init_attn(key, D, H, dk, dv):
    keys = jax.random.split(key, 3 * H + 1)
    wqs, bqs, wks, bks, wvs, bvs = [], [], [], [], [], []
    for h in range(H):
        w, b = _init_linear(keys[3 * h + 0], D, dk); wqs.append(w); bqs.append(b)
        w, b = _init_linear(keys[3 * h + 1], D, dk); wks.append(w); bks.append(b)
        w, b = _init_linear(keys[3 * h + 2], D, dv); wvs.append(w); bvs.append(b)
    wo, bo = _init_linear(keys[-1], H * dv, D)
    return dict(
        wq=jnp.concatenate(wqs, axis=1), bq=jnp.concatenate(bqs).reshape(1, H * dk),
        wk=jnp.concatenate(wks, axis=1), bk=jnp.concatenate(bks).reshape(1, H * dk),
        wv=jnp.concatenate(wvs, axis=1), bv=jnp.concatenate(bvs).reshape(1, H * dv),
        wo=wo.reshape(H, dv, D), bo=bo.reshape(1, D),
        g=jnp.ones((1, D), jnp.float32), b=jnp.zeros((1, D), jnp.float32),
    )


def _init_ff(key, D, F):
    k1, k2 = jax.random.split(key)
    w1, b1 = _init_linear(k1, D, F)
    w2, b2 = _init_linear(k2, F, D)
    return dict(
        w1=w1, b1=b1.reshape(1, F), w2=w2, b2=b2.reshape(1, D),
        g=jnp.ones((1, D), jnp.float32), b=jnp.zeros((1, D), jnp.float32),
    )


def _init_encoder_layer(key, D, H, dk, dv, F):
    ka, kf = jax.random.split(key)
    return dict(attn=_init_attn(ka, D, H, dk, dv), ff=_init_ff(kf, D, F))


def _init_decoder_layer(key, D, H, dk, dv, F):
    k1, k2, kf = jax.random.split(key, 3)
    return dict(attn1=_init_attn(k1, D, H, dk, dv),
                attn2=_init_attn(k2, D, H, dk, dv),
                ff=_init_ff(kf, D, F))


# ---------------------------------------------------------------------------
if __name__ == "__main__":
    # Small, TPU-friendly shapes: lane-dense D=128, H*dk=128, F=256.
    B, S, D, H, F = 2, 8, 128, 4, 256
    NUM_ENC, NUM_DEC = 2, 2
    dk = dv = D // H

    root = jax.random.PRNGKey(0)
    k_enc, k_dec, k_head, k_src, k_tgt = jax.random.split(root, 5)
    enc_keys = jax.random.split(k_enc, NUM_ENC)
    dec_keys = jax.random.split(k_dec, NUM_DEC)

    out_w, out_b = _init_linear(k_head, D, D)
    params = dict(
        encoder=[_init_encoder_layer(k, D, H, dk, dv, F) for k in enc_keys],
        decoder=[_init_decoder_layer(k, D, H, dk, dv, F) for k in dec_keys],
        out_w=out_w, out_b=out_b.reshape(1, D),
    )

    src = jax.random.normal(k_src, (B, S, D), jnp.float32)
    tgt = jax.random.normal(k_tgt, (B, S, D), jnp.float32)

    out = transformer_forward(src, tgt, params, num_heads=H)
    out = jax.block_until_ready(out)

    ref = transformer_ref(src, tgt, params, H)
    assert out.shape == (B, S, D)
    max_err = float(jnp.max(jnp.abs(out - ref)))
    assert jnp.allclose(out, ref, atol=1e-2, rtol=1e-2), max_err

    print("KERNEL_OK")
</pallas_src>

<mosaic_0001>
module attributes {stable_mosaic.version = 11 : i64} {
  func.func @kernel(%arg0: i32, %arg1: memref<1x8x128xf32, #tpu.memory_space<vmem>>, %arg2: memref<128x128xf32, #tpu.memory_space<vmem>>, %arg3: memref<1x128xf32, #tpu.memory_space<vmem>>, %arg4: memref<128x128xf32, #tpu.memory_space<vmem>>, %arg5: memref<1x128xf32, #tpu.memory_space<vmem>>, %arg6: memref<128x128xf32, #tpu.memory_space<vmem>>, %arg7: memref<1x128xf32, #tpu.memory_space<vmem>>, %arg8: memref<4x32x128xf32, #tpu.memory_space<vmem>>, %arg9: memref<1x128xf32, #tpu.memory_space<vmem>>, %arg10: memref<1x128xf32, #tpu.memory_space<vmem>>, %arg11: memref<1x128xf32, #tpu.memory_space<vmem>>, %arg12: memref<128x256xf32, #tpu.memory_space<vmem>>, %arg13: memref<1x256xf32, #tpu.memory_space<vmem>>, %arg14: memref<256x128xf32, #tpu.memory_space<vmem>>, %arg15: memref<1x128xf32, #tpu.memory_space<vmem>>, %arg16: memref<1x128xf32, #tpu.memory_space<vmem>>, %arg17: memref<1x128xf32, #tpu.memory_space<vmem>>, %arg18: memref<1x8x128xf32, #tpu.memory_space<vmem>>) attributes {dimension_semantics = [#tpu.dimension_semantics<parallel>], iteration_bounds = array<i64: 2>, scalar_prefetch = 0 : i64, scratch_operands = 0 : i64, tpu.core_type = #tpu.core_type<tc>, window_params = [{transform_indices = @transform_0, window_bounds = array<i64: 1, 8, 128>}, {pipeline_mode = #tpu.pipeline_mode<synchronous>, transform_indices = @transform_1, window_bounds = array<i64: 128, 128>}, {pipeline_mode = #tpu.pipeline_mode<synchronous>, transform_indices = @transform_2, window_bounds = array<i64: 1, 128>}, {pipeline_mode = #tpu.pipeline_mode<synchronous>, transform_indices = @transform_3, window_bounds = array<i64: 128, 128>}, {pipeline_mode = #tpu.pipeline_mode<synchronous>, transform_indices = @transform_4, window_bounds = array<i64: 1, 128>}, {pipeline_mode = #tpu.pipeline_mode<synchronous>, transform_indices = @transform_5, window_bounds = array<i64: 128, 128>}, {pipeline_mode = #tpu.pipeline_mode<synchronous>, transform_indices = @transform_6, window_bounds = array<i64: 1, 128>}, {pipeline_mode = #tpu.pipeline_mode<synchronous>, transform_indices = @transform_7, window_bounds = array<i64: 4, 32, 128>}, {pipeline_mode = #tpu.pipeline_mode<synchronous>, transform_indices = @transform_8, window_bounds = array<i64: 1, 128>}, {pipeline_mode = #tpu.pipeline_mode<synchronous>, transform_indices = @transform_9, window_bounds = array<i64: 1, 128>}, {pipeline_mode = #tpu.pipeline_mode<synchronous>, transform_indices = @transform_10, window_bounds = array<i64: 1, 128>}, {pipeline_mode = #tpu.pipeline_mode<synchronous>, transform_indices = @transform_11, window_bounds = array<i64: 128, 256>}, {pipeline_mode = #tpu.pipeline_mode<synchronous>, transform_indices = @transform_12, window_bounds = array<i64: 1, 256>}, {pipeline_mode = #tpu.pipeline_mode<synchronous>, transform_indices = @transform_13, window_bounds = array<i64: 256, 128>}, {pipeline_mode = #tpu.pipeline_mode<synchronous>, transform_indices = @transform_14, window_bounds = array<i64: 1, 128>}, {pipeline_mode = #tpu.pipeline_mode<synchronous>, transform_indices = @transform_15, window_bounds = array<i64: 1, 128>}, {pipeline_mode = #tpu.pipeline_mode<synchronous>, transform_indices = @transform_16, window_bounds = array<i64: 1, 128>}, {transform_indices = @transform_17, window_bounds = array<i64: 1, 8, 128>}]} {
    %c0 = arith.constant 0 : index
    %c0_0 = arith.constant 0 : index
    %0 = vector.load %arg2[%c0, %c0_0] : memref<128x128xf32, #tpu.memory_space<vmem>>, vector<128x128xf32>
    %c0_1 = arith.constant 0 : index
    %c0_2 = arith.constant 0 : index
    %1 = vector.load %arg3[%c0_1, %c0_2] : memref<1x128xf32, #tpu.memory_space<vmem>>, vector<1x128xf32>
    %c0_3 = arith.constant 0 : index
    %c0_4 = arith.constant 0 : index
    %2 = vector.load %arg4[%c0_3, %c0_4] : memref<128x128xf32, #tpu.memory_space<vmem>>, vector<128x128xf32>
    %c0_5 = arith.constant 0 : index
    %c0_6 = arith.constant 0 : index
    %3 = vector.load %arg5[%c0_5, %c0_6] : memref<1x128xf32, #tpu.memory_space<vmem>>, vector<1x128xf32>
    %c0_7 = arith.constant 0 : index
    %c0_8 = arith.constant 0 : index
    %4 = vector.load %arg6[%c0_7, %c0_8] : memref<128x128xf32, #tpu.memory_space<vmem>>, vector<128x128xf32>
    %c0_9 = arith.constant 0 : index
    %c0_10 = arith.constant 0 : index
    %5 = vector.load %arg7[%c0_9, %c0_10] : memref<1x128xf32, #tpu.memory_space<vmem>>, vector<1x128xf32>
    %c0_11 = arith.constant 0 : index
    %c0_12 = arith.constant 0 : index
    %c0_13 = arith.constant 0 : index
    %6 = vector.load %arg8[%c0_11, %c0_12, %c0_13] : memref<4x32x128xf32, #tpu.memory_space<vmem>>, vector<4x32x128xf32>
    %c0_14 = arith.constant 0 : index
    %c0_15 = arith.constant 0 : index
    %7 = vector.load %arg9[%c0_14, %c0_15] : memref<1x128xf32, #tpu.memory_space<vmem>>, vector<1x128xf32>
    %c0_16 = arith.constant 0 : index
    %c0_17 = arith.constant 0 : index
    %8 = vector.load %arg10[%c0_16, %c0_17] : memref<1x128xf32, #tpu.memory_space<vmem>>, vector<1x128xf32>
    %c0_18 = arith.constant 0 : index
    %c0_19 = arith.constant 0 : index
    %9 = vector.load %arg11[%c0_18, %c0_19] : memref<1x128xf32, #tpu.memory_space<vmem>>, vector<1x128xf32>
    %c0_20 = arith.constant 0 : index
    %c0_21 = arith.constant 0 : index
    %10 = vector.load %arg12[%c0_20, %c0_21] : memref<128x256xf32, #tpu.memory_space<vmem>>, vector<128x256xf32>
    %c0_22 = arith.constant 0 : index
    %c0_23 = arith.constant 0 : index
    %11 = vector.load %arg13[%c0_22, %c0_23] : memref<1x256xf32, #tpu.memory_space<vmem>>, vector<1x256xf32>
    %c0_24 = arith.constant 0 : index
    %c0_25 = arith.constant 0 : index
    %12 = vector.load %arg14[%c0_24, %c0_25] : memref<256x128xf32, #tpu.memory_space<vmem>>, vector<256x128xf32>
    %c0_26 = arith.constant 0 : index
    %c0_27 = arith.constant 0 : index
    %13 = vector.load %arg15[%c0_26, %c0_27] : memref<1x128xf32, #tpu.memory_space<vmem>>, vector<1x128xf32>
    %c0_28 = arith.constant 0 : index
    %c0_29 = arith.constant 0 : index
    %14 = vector.load %arg16[%c0_28, %c0_29] : memref<1x128xf32, #tpu.memory_space<vmem>>, vector<1x128xf32>
    %c0_30 = arith.constant 0 : index
    %c0_31 = arith.constant 0 : index
    %15 = vector.load %arg17[%c0_30, %c0_31] : memref<1x128xf32, #tpu.memory_space<vmem>>, vector<1x128xf32>
    %c0_32 = arith.constant 0 : index
    %c0_33 = arith.constant 0 : index
    %c0_34 = arith.constant 0 : index
    %16 = vector.load %arg1[%c0_32, %c0_33, %c0_34] : memref<1x8x128xf32, #tpu.memory_space<vmem>>, vector<1x8x128xf32>
    %17 = vector.shape_cast %16 : vector<1x8x128xf32> to vector<8x128xf32>
    %18 = arith.truncf %17 : vector<8x128xf32> to vector<8x128xbf16>
    %19 = arith.truncf %0 : vector<128x128xf32> to vector<128x128xbf16>
    %cst = arith.constant dense<0.000000e+00> : vector<8x128xf32>
    %20 = tpu.matmul %18, %19, %cst {dimension_numbers = #tpu.dot_dimension_numbers<[1], [0], [0], [1], [0, 0, 1, 1], [], []>} : vector<8x128xbf16>, vector<128x128xbf16>, vector<8x128xf32> -> vector<8x128xf32>
    %21 = vector.broadcast %1 : vector<1x128xf32> to vector<8x128xf32>
    %22 = arith.addf %20, %21 : vector<8x128xf32>
    %23 = arith.truncf %17 : vector<8x128xf32> to vector<8x128xbf16>
    %24 = arith.truncf %2 : vector<128x128xf32> to vector<128x128xbf16>
    %cst_35 = arith.constant dense<0.000000e+00> : vector<8x128xf32>
    %25 = tpu.matmul %23, %24, %cst_35 {dimension_numbers = #tpu.dot_dimension_numbers<[1], [0], [0], [1], [0, 0, 1, 1], [], []>} : vector<8x128xbf16>, vector<128x128xbf16>, vector<8x128xf32> -> vector<8x128xf32>
    %26 = vector.broadcast %3 : vector<1x128xf32> to vector<8x128xf32>
    %27 = arith.addf %25, %26 : vector<8x128xf32>
    %28 = arith.truncf %17 : vector<8x128xf32> to vector<8x128xbf16>
    %29 = arith.truncf %4 : vector<128x128xf32> to vector<128x128xbf16>
    %cst_36 = arith.constant dense<0.000000e+00> : vector<8x128xf32>
    %30 = tpu.matmul %28, %29, %cst_36 {dimension_numbers = #tpu.dot_dimension_numbers<[1], [0], [0], [1], [0, 0, 1, 1], [], []>} : vector<8x128xbf16>, vector<128x128xbf16>, vector<8x128xf32> -> vector<8x128xf32>
    %31 = vector.broadcast %5 : vector<1x128xf32> to vector<8x128xf32>
    %32 = arith.addf %30, %31 : vector<8x128xf32>
    %cst_37 = arith.constant 0.176776692 : f32
    %33 = vector.broadcast %cst_37 : f32 to vector<8x128xf32>
    %34 = arith.mulf %22, %33 : vector<8x128xf32>
    %35 = arith.truncf %34 : vector<8x128xf32> to vector<8x128xbf16>
    %36 = arith.truncf %27 : vector<8x128xf32> to vector<8x128xbf16>
    %37 = arith.truncf %32 : vector<8x128xf32> to vector<8x128xbf16>
    %38 = arith.truncf %6 : vector<4x32x128xf32> to vector<4x32x128xbf16>
    %cst_38 = arith.constant 0.000000e+00 : f32
    %39 = vector.broadcast %cst_38 : f32 to vector<8x128xf32>
    %40 = vector.extract_strided_slice %35 {offsets = [0, 0], sizes = [8, 32], strides = [1, 1]} : vector<8x128xbf16> to vector<8x32xbf16>
    %41 = vector.extract_strided_slice %36 {offsets = [0, 0], sizes = [8, 32], strides = [1, 1]} : vector<8x128xbf16> to vector<8x32xbf16>
    %42 = vector.extract_strided_slice %37 {offsets = [0, 0], sizes = [8, 32], strides = [1, 1]} : vector<8x128xbf16> to vector<8x32xbf16>
    %cst_39 = arith.constant dense<0.000000e+00> : vector<8x8xf32>
    %43 = tpu.matmul %40, %41, %cst_39 {dimension_numbers = #tpu.dot_dimension_numbers<[1], [1], [0], [0], [0, 0, 1, 0], [], []>} : vector<8x32xbf16>, vector<8x32xbf16>, vector<8x8xf32> -> vector<8x8xf32>
    %cst_40 = arith.constant dense<0xFF800000> : vector<8xf32>
    %44 = vector.multi_reduction <maximumf>, %43, %cst_40 [1] : vector<8x8xf32> to vector<8xf32>
    %45 = vector.shape_cast %44 : vector<8xf32> to vector<8x1xf32>
    %46 = vector.broadcast %45 : vector<8x1xf32> to vector<8x8xf32>
    %47 = arith.subf %43, %46 : vector<8x8xf32>
    %48 = math.exp %47 : vector<8x8xf32>
    %cst_41 = arith.constant dense<0.000000e+00> : vector<8xf32>
    %49 = vector.multi_reduction <add>, %48, %cst_41 [1] : vector<8x8xf32> to vector<8xf32>
    %50 = vector.shape_cast %49 : vector<8xf32> to vector<8x1xf32>
    %51 = tpu.reciprocal %50 {approx = true} : vector<8x1xf32> -> vector<8x1xf32>
    %52 = vector.broadcast %51 : vector<8x1xf32> to vector<8x8xf32>
    %53 = arith.mulf %48, %52 : vector<8x8xf32>
    %54 = arith.truncf %53 : vector<8x8xf32> to vector<8x8xbf16>
    %cst_42 = arith.constant dense<0.000000e+00> : vector<8x32xf32>
    %55 = tpu.matmul %54, %42, %cst_42 {dimension_numbers = #tpu.dot_dimension_numbers<[1], [0], [0], [1], [0, 0, 1, 1], [], []>} : vector<8x8xbf16>, vector<8x32xbf16>, vector<8x32xf32> -> vector<8x32xf32>
    %56 = arith.truncf %55 : vector<8x32xf32> to vector<8x32xbf16>
    %57 = vector.extract_strided_slice %38 {offsets = [0, 0, 0], sizes = [1, 32, 128], strides = [1, 1, 1]} : vector<4x32x128xbf16> to vector<1x32x128xbf16>
    %58 = vector.shape_cast %57 : vector<1x32x128xbf16> to vector<32x128xbf16>
    %cst_43 = arith.constant dense<0.000000e+00> : vector<8x128xf32>
    %59 = tpu.matmul %56, %58, %cst_43 {dimension_numbers = #tpu.dot_dimension_numbers<[1], [0], [0], [1], [0, 0, 1, 1], [], []>} : vector<8x32xbf16>, vector<32x128xbf16>, vector<8x128xf32> -> vector<8x128xf32>
    %60 = arith.addf %39, %59 : vector<8x128xf32>
    %61 = vector.extract_strided_slice %35 {offsets = [0, 32], sizes = [8, 32], strides = [1, 1]} : vector<8x128xbf16> to vector<8x32xbf16>
    %62 = vector.extract_strided_slice %36 {offsets = [0, 32], sizes = [8, 32], strides = [1, 1]} : vector<8x128xbf16> to vector<8x32xbf16>
    %63 = vector.extract_strided_slice %37 {offsets = [0, 32], sizes = [8, 32], strides = [1, 1]} : vector<8x128xbf16> to vector<8x32xbf16>
    %cst_44 = arith.constant dense<0.000000e+00> : vector<8x8xf32>
    %64 = tpu.matmul %61, %62, %cst_44 {dimension_numbers = #tpu.dot_dimension_numbers<[1], [1], [0], [0], [0, 0, 1, 0], [], []>} : vector<8x32xbf16>, vector<8x32xbf16>, vector<8x8xf32> -> vector<8x8xf32>
    %cst_45 = arith.constant dense<0xFF800000> : vector<8xf32>
    %65 = vector.multi_reduction <maximumf>, %64, %cst_45 [1] : vector<8x8xf32> to vector<8xf32>
    %66 = vector.shape_cast %65 : vector<8xf32> to vector<8x1xf32>
    %67 = vector.broadcast %66 : vector<8x1xf32> to vector<8x8xf32>
    %68 = arith.subf %64, %67 : vector<8x8xf32>
    %69 = math.exp %68 : vector<8x8xf32>
    %cst_46 = arith.constant dense<0.000000e+00> : vector<8xf32>
    %70 = vector.multi_reduction <add>, %69, %cst_46 [1] : vector<8x8xf32> to vector<8xf32>
    %71 = vector.shape_cast %70 : vector<8xf32> to vector<8x1xf32>
    %72 = tpu.reciprocal %71 {approx = true} : vector<8x1xf32> -> vector<8x1xf32>
    %73 = vector.broadcast %72 : vector<8x1xf32> to vector<8x8xf32>
    %74 = arith.mulf %69, %73 : vector<8x8xf32>
    %75 = arith.truncf %74 : vector<8x8xf32> to vector<8x8xbf16>
    %cst_47 = arith.constant dense<0.000000e+00> : vector<8x32xf32>
    %76 = tpu.matmul %75, %63, %cst_47 {dimension_numbers = #tpu.dot_dimension_numbers<[1], [0], [0], [1], [0, 0, 1, 1], [], []>} : vector<8x8xbf16>, vector<8x32xbf16>, vector<8x32xf32> -> vector<8x32xf32>
    %77 = arith.truncf %76 : vector<8x32xf32> to vector<8x32xbf16>
    %78 = vector.extract_strided_slice %38 {offsets = [1, 0, 0], sizes = [1, 32, 128], strides = [1, 1, 1]} : vector<4x32x128xbf16> to vector<1x32x128xbf16>
    %79 = vector.shape_cast %78 : vector<1x32x128xbf16> to vector<32x128xbf16>
    %cst_48 = arith.constant dense<0.000000e+00> : vector<8x128xf32>
    %80 = tpu.matmul %77, %79, %cst_48 {dimension_numbers = #tpu.dot_dimension_numbers<[1], [0], [0], [1], [0, 0, 1, 1], [], []>} : vector<8x32xbf16>, vector<32x128xbf16>, vector<8x128xf32> -> vector<8x128xf32>
    %81 = arith.addf %60, %80 : vector<8x128xf32>
    %82 = vector.extract_strided_slice %35 {offsets = [0, 64], sizes = [8, 32], strides = [1, 1]} : vector<8x128xbf16> to vector<8x32xbf16>
    %83 = vector.extract_strided_slice %36 {offsets = [0, 64], sizes = [8, 32], strides = [1, 1]} : vector<8x128xbf16> to vector<8x32xbf16>
    %84 = vector.extract_strided_slice %37 {offsets = [0, 64], sizes = [8, 32], strides = [1, 1]} : vector<8x128xbf16> to vector<8x32xbf16>
    %cst_49 = arith.constant dense<0.000000e+00> : vector<8x8xf32>
    %85 = tpu.matmul %82, %83, %cst_49 {dimension_numbers = #tpu.dot_dimension_numbers<[1], [1], [0], [0], [0, 0, 1, 0], [], []>} : vector<8x32xbf16>, vector<8x32xbf16>, vector<8x8xf32> -> vector<8x8xf32>
    %cst_50 = arith.constant dense<0xFF800000> : vector<8xf32>
    %86 = vector.multi_reduction <maximumf>, %85, %cst_50 [1] : vector<8x8xf32> to vector<8xf32>
    %87 = vector.shape_cast %86 : vector<8xf32> to vector<8x1xf32>
    %88 = vector.broadcast %87 : vector<8x1xf32> to vector<8x8xf32>
    %89 = arith.subf %85, %88 : vector<8x8xf32>
    %90 = math.exp %89 : vector<8x8xf32>
    %cst_51 = arith.constant dense<0.000000e+00> : vector<8xf32>
    %91 = vector.multi_reduction <add>, %90, %cst_51 [1] : vector<8x8xf32> to vector<8xf32>
    %92 = vector.shape_cast %91 : vector<8xf32> to vector<8x1xf32>
    %93 = tpu.reciprocal %92 {approx = true} : vector<8x1xf32> -> vector<8x1xf32>
    %94 = vector.broadcast %93 : vector<8x1xf32> to vector<8x8xf32>
    %95 = arith.mulf %90, %94 : vector<8x8xf32>
    %96 = arith.truncf %95 : vector<8x8xf32> to vector<8x8xbf16>
    %cst_52 = arith.constant dense<0.000000e+00> : vector<8x32xf32>
    %97 = tpu.matmul %96, %84, %cst_52 {dimension_numbers = #tpu.dot_dimension_numbers<[1], [0], [0], [1], [0, 0, 1, 1], [], []>} : vector<8x8xbf16>, vector<8x32xbf16>, vector<8x32xf32> -> vector<8x32xf32>
    %98 = arith.truncf %97 : vector<8x32xf32> to vector<8x32xbf16>
    %99 = vector.extract_strided_slice %38 {offsets = [2, 0, 0], sizes = [1, 32, 128], strides = [1, 1, 1]} : vector<4x32x128xbf16> to vector<1x32x128xbf16>
    %100 = vector.shape_cast %99 : vector<1x32x128xbf16> to vector<32x128xbf16>
    %cst_53 = arith.constant dense<0.000000e+00> : vector<8x128xf32>
    %101 = tpu.matmul %98, %100, %cst_53 {dimension_numbers = #tpu.dot_dimension_numbers<[1], [0], [0], [1], [0, 0, 1, 1], [], []>} : vector<8x32xbf16>, vector<32x128xbf16>, vector<8x128xf32> -> vector<8x128xf32>
    %102 = arith.addf %81, %101 : vector<8x128xf32>
    %103 = vector.extract_strided_slice %35 {offsets = [0, 96], sizes = [8, 32], strides = [1, 1]} : vector<8x128xbf16> to vector<8x32xbf16>
    %104 = vector.extract_strided_slice %36 {offsets = [0, 96], sizes = [8, 32], strides = [1, 1]} : vector<8x128xbf16> to vector<8x32xbf16>
    %105 = vector.extract_strided_slice %37 {offsets = [0, 96], sizes = [8, 32], strides = [1, 1]} : vector<8x128xbf16> to vector<8x32xbf16>
    %cst_54 = arith.constant dense<0.000000e+00> : vector<8x8xf32>
    %106 = tpu.matmul %103, %104, %cst_54 {dimension_numbers = #tpu.dot_dimension_numbers<[1], [1], [0], [0], [0, 0, 1, 0], [], []>} : vector<8x32xbf16>, vector<8x32xbf16>, vector<8x8xf32> -> vector<8x8xf32>
    %cst_55 = arith.constant dense<0xFF800000> : vector<8xf32>
    %107 = vector.multi_reduction <maximumf>, %106, %cst_55 [1] : vector<8x8xf32> to vector<8xf32>
    %108 = vector.shape_cast %107 : vector<8xf32> to vector<8x1xf32>
    %109 = vector.broadcast %108 : vector<8x1xf32> to vector<8x8xf32>
    %110 = arith.subf %106, %109 : vector<8x8xf32>
    %111 = math.exp %110 : vector<8x8xf32>
    %cst_56 = arith.constant dense<0.000000e+00> : vector<8xf32>
    %112 = vector.multi_reduction <add>, %111, %cst_56 [1] : vector<8x8xf32> to vector<8xf32>
    %113 = vector.shape_cast %112 : vector<8xf32> to vector<8x1xf32>
    %114 = tpu.reciprocal %113 {approx = true} : vector<8x1xf32> -> vector<8x1xf32>
    %115 = vector.broadcast %114 : vector<8x1xf32> to vector<8x8xf32>
    %116 = arith.mulf %111, %115 : vector<8x8xf32>
    %117 = arith.truncf %116 : vector<8x8xf32> to vector<8x8xbf16>
    %cst_57 = arith.constant dense<0.000000e+00> : vector<8x32xf32>
    %118 = tpu.matmul %117, %105, %cst_57 {dimension_numbers = #tpu.dot_dimension_numbers<[1], [0], [0], [1], [0, 0, 1, 1], [], []>} : vector<8x8xbf16>, vector<8x32xbf16>, vector<8x32xf32> -> vector<8x32xf32>
    %119 = arith.truncf %118 : vector<8x32xf32> to vector<8x32xbf16>
    %120 = vector.extract_strided_slice %38 {offsets = [3, 0, 0], sizes = [1, 32, 128], strides = [1, 1, 1]} : vector<4x32x128xbf16> to vector<1x32x128xbf16>
    %121 = vector.shape_cast %120 : vector<1x32x128xbf16> to vector<32x128xbf16>
    %cst_58 = arith.constant dense<0.000000e+00> : vector<8x128xf32>
    %122 = tpu.matmul %119, %121, %cst_58 {dimension_numbers = #tpu.dot_dimension_numbers<[1], [0], [0], [1], [0, 0, 1, 1], [], []>} : vector<8x32xbf16>, vector<32x128xbf16>, vector<8x128xf32> -> vector<8x128xf32>
    %123 = arith.addf %102, %122 : vector<8x128xf32>
    %124 = vector.broadcast %7 : vector<1x128xf32> to vector<8x128xf32>
    %125 = arith.addf %123, %124 : vector<8x128xf32>
    %126 = arith.addf %17, %125 : vector<8x128xf32>
    %cst_59 = arith.constant dense<0.000000e+00> : vector<8xf32>
    %127 = vector.multi_reduction <add>, %126, %cst_59 [1] : vector<8x128xf32> to vector<8xf32>
    %128 = vector.shape_cast %127 : vector<8xf32> to vector<8x1xf32>
    %cst_60 = arith.constant 1.280000e+02 : f32
    %129 = vector.broadcast %cst_60 : f32 to vector<8x1xf32>
    %130 = arith.divf %128, %129 : vector<8x1xf32>
    %131 = vector.broadcast %130 : vector<8x1xf32> to vector<8x128xf32>
    %132 = arith.subf %126, %131 : vector<8x128xf32>
    %133 = arith.mulf %132, %132 : vector<8x128xf32>
    %cst_61 = arith.constant dense<0.000000e+00> : vector<8xf32>
    %134 = vector.multi_reduction <add>, %133, %cst_61 [1] : vector<8x128xf32> to vector<8xf32>
    %135 = vector.shape_cast %134 : vector<8xf32> to vector<8x1xf32>
    %cst_62 = arith.constant 1.280000e+02 : f32
    %136 = vector.broadcast %cst_62 : f32 to vector<8x1xf32>
    %137 = arith.divf %135, %136 : vector<8x1xf32>
    %138 = vector.broadcast %130 : vector<8x1xf32> to vector<8x128xf32>
    %139 = arith.subf %126, %138 : vector<8x128xf32>
    %cst_63 = arith.constant 9.99999974E-6 : f32
    %140 = vector.broadcast %cst_63 : f32 to vector<8x1xf32>
    %141 = arith.addf %137, %140 : vector<8x1xf32>
    %142 = math.rsqrt %141 : vector<8x1xf32>
    %143 = vector.broadcast %142 : vector<8x1xf32> to vector<8x128xf32>
    %144 = arith.mulf %139, %143 : vector<8x128xf32>
    %145 = vector.broadcast %8 : vector<1x128xf32> to vector<8x128xf32>
    %146 = arith.mulf %144, %145 : vector<8x128xf32>
    %147 = vector.broadcast %9 : vector<1x128xf32> to vector<8x128xf32>
    %148 = arith.addf %146, %147 : vector<8x128xf32>
    %149 = arith.truncf %148 : vector<8x128xf32> to vector<8x128xbf16>
    %150 = arith.truncf %10 : vector<128x256xf32> to vector<128x256xbf16>
    %cst_64 = arith.constant dense<0.000000e+00> : vector<8x256xf32>
    %151 = tpu.matmul %149, %150, %cst_64 {dimension_numbers = #tpu.dot_dimension_numbers<[1], [0], [0], [1], [0, 0, 1, 1], [], []>} : vector<8x128xbf16>, vector<128x256xbf16>, vector<8x256xf32> -> vector<8x256xf32>
    %152 = vector.broadcast %11 : vector<1x256xf32> to vector<8x256xf32>
    %153 = arith.addf %151, %152 : vector<8x256xf32>
    %cst_65 = arith.constant 0.000000e+00 : f32
    %154 = vector.broadcast %cst_65 : f32 to vector<8x256xf32>
    %155 = arith.maximumf %153, %154 : vector<8x256xf32>
    %156 = arith.truncf %155 : vector<8x256xf32> to vector<8x256xbf16>
    %157 = arith.truncf %12 : vector<256x128xf32> to vector<256x128xbf16>
    %cst_66 = arith.constant dense<0.000000e+00> : vector<8x128xf32>
    %158 = tpu.matmul %156, %157, %cst_66 {dimension_numbers = #tpu.dot_dimension_numbers<[1], [0], [0], [1], [0, 0, 1, 1], [], []>} : vector<8x256xbf16>, vector<256x128xbf16>, vector<8x128xf32> -> vector<8x128xf32>
    %159 = vector.broadcast %13 : vector<1x128xf32> to vector<8x128xf32>
    %160 = arith.addf %158, %159 : vector<8x128xf32>
    %161 = arith.addf %148, %160 : vector<8x128xf32>
    %cst_67 = arith.constant dense<0.000000e+00> : vector<8xf32>
    %162 = vector.multi_reduction <add>, %161, %cst_67 [1] : vector<8x128xf32> to vector<8xf32>
    %163 = vector.shape_cast %162 : vector<8xf32> to vector<8x1xf32>
    %cst_68 = arith.constant 1.280000e+02 : f32
    %164 = vector.broadcast %cst_68 : f32 to vector<8x1xf32>
    %165 = arith.divf %163, %164 : vector<8x1xf32>
    %166 = vector.broadcast %165 : vector<8x1xf32> to vector<8x128xf32>
    %167 = arith.subf %161, %166 : vector<8x128xf32>
    %168 = arith.mulf %167, %167 : vector<8x128xf32>
    %cst_69 = arith.constant dense<0.000000e+00> : vector<8xf32>
    %169 = vector.multi_reduction <add>, %168, %cst_69 [1] : vector<8x128xf32> to vector<8xf32>
    %170 = vector.shape_cast %169 : vector<8xf32> to vector<8x1xf32>
    %cst_70 = arith.constant 1.280000e+02 : f32
    %171 = vector.broadcast %cst_70 : f32 to vector<8x1xf32>
    %172 = arith.divf %170, %171 : vector<8x1xf32>
    %173 = vector.broadcast %165 : vector<8x1xf32> to vector<8x128xf32>
    %174 = arith.subf %161, %173 : vector<8x128xf32>
    %cst_71 = arith.constant 9.99999974E-6 : f32
    %175 = vector.broadcast %cst_71 : f32 to vector<8x1xf32>
    %176 = arith.addf %172, %175 : vector<8x1xf32>
    %177 = math.rsqrt %176 : vector<8x1xf32>
    %178 = vector.broadcast %177 : vector<8x1xf32> to vector<8x128xf32>
    %179 = arith.mulf %174, %178 : vector<8x128xf32>
    %180 = vector.broadcast %14 : vector<1x128xf32> to vector<8x128xf32>
    %181 = arith.mulf %179, %180 : vector<8x128xf32>
    %182 = vector.broadcast %15 : vector<1x128xf32> to vector<8x128xf32>
    %183 = arith.addf %181, %182 : vector<8x128xf32>
    %c0_72 = arith.constant 0 : index
    %c0_73 = arith.constant 0 : index
    %c0_74 = arith.constant 0 : index
    %184 = vector.load %arg18[%c0_72, %c0_73, %c0_74] : memref<1x8x128xf32, #tpu.memory_space<vmem>>, vector<1x8x128xf32>
    %185 = vector.shape_cast %184 : vector<1x8x128xf32> to vector<8x128xf32>
    %186 = vector.shape_cast %183 : vector<8x128xf32> to vector<1x8x128xf32>
    tpu.vector_store %arg18[%c0_72, %c0_73, %c0_74], %186 {strides = array<i32>} : memref<1x8x128xf32, #tpu.memory_space<vmem>>, vector<1x8x128xf32>,
    return
  }
  func.func @transform_0(%arg0: i32) -> (i32, i32, i32) {
    %c0_i32 = arith.constant 0 : i32
    %c0_i32_0 = arith.constant 0 : i32
    %c0_i32_1 = arith.constant 0 : i32
    return %arg0, %c0_i32, %c0_i32_0 : i32, i32, i32
  }
  func.func @transform_1(%arg0: i32) -> (i32, i32) {
    %c0_i32 = arith.constant 0 : i32
    %c0_i32_0 = arith.constant 0 : i32
    %c0_i32_1 = arith.constant 0 : i32
    return %c0_i32, %c0_i32_0 : i32, i32
  }
  func.func @transform_2(%arg0: i32) -> (i32, i32) {
    %c0_i32 = arith.constant 0 : i32
    %c0_i32_0 = arith.constant 0 : i32
    %c0_i32_1 = arith.constant 0 : i32
    return %c0_i32, %c0_i32_0 : i32, i32
  }
  func.func @transform_3(%arg0: i32) -> (i32, i32) {
    %c0_i32 = arith.constant 0 : i32
    %c0_i32_0 = arith.constant 0 : i32
    %c0_i32_1 = arith.constant 0 : i32
    return %c0_i32, %c0_i32_0 : i32, i32
  }
  func.func @transform_4(%arg0: i32) -> (i32, i32) {
    %c0_i32 = arith.constant 0 : i32
    %c0_i32_0 = arith.constant 0 : i32
    %c0_i32_1 = arith.constant 0 : i32
    return %c0_i32, %c0_i32_0 : i32, i32
  }
  func.func @transform_5(%arg0: i32) -> (i32, i32) {
    %c0_i32 = arith.constant 0 : i32
    %c0_i32_0 = arith.constant 0 : i32
    %c0_i32_1 = arith.constant 0 : i32
    return %c0_i32, %c0_i32_0 : i32, i32
  }
  func.func @transform_6(%arg0: i32) -> (i32, i32) {
    %c0_i32 = arith.constant 0 : i32
    %c0_i32_0 = arith.constant 0 : i32
    %c0_i32_1 = arith.constant 0 : i32
    return %c0_i32, %c0_i32_0 : i32, i32
  }
  func.func @transform_7(%arg0: i32) -> (i32, i32, i32) {
    %c0_i32 = arith.constant 0 : i32
    %c0_i32_0 = arith.constant 0 : i32
    %c0_i32_1 = arith.constant 0 : i32
    %c0_i32_2 = arith.constant 0 : i32
    return %c0_i32, %c0_i32_0, %c0_i32_1 : i32, i32, i32
  }
  func.func @transform_8(%arg0: i32) -> (i32, i32) {
    %c0_i32 = arith.constant 0 : i32
    %c0_i32_0 = arith.constant 0 : i32
    %c0_i32_1 = arith.constant 0 : i32
    return %c0_i32, %c0_i32_0 : i32, i32
  }
  func.func @transform_9(%arg0: i32) -> (i32, i32) {
    %c0_i32 = arith.constant 0 : i32
    %c0_i32_0 = arith.constant 0 : i32
    %c0_i32_1 = arith.constant 0 : i32
    return %c0_i32, %c0_i32_0 : i32, i32
  }
  func.func @transform_10(%arg0: i32) -> (i32, i32) {
    %c0_i32 = arith.constant 0 : i32
    %c0_i32_0 = arith.constant 0 : i32
    %c0_i32_1 = arith.constant 0 : i32
    return %c0_i32, %c0_i32_0 : i32, i32
  }
  func.func @transform_11(%arg0: i32) -> (i32, i32) {
    %c0_i32 = arith.constant 0 : i32
    %c0_i32_0 = arith.constant 0 : i32
    %c0_i32_1 = arith.constant 0 : i32
    return %c0_i32, %c0_i32_0 : i32, i32
  }
  func.func @transform_12(%arg0: i32) -> (i32, i32) {
    %c0_i32 = arith.constant 0 : i32
    %c0_i32_0 = arith.constant 0 : i32
    %c0_i32_1 = arith.constant 0 : i32
    return %c0_i32, %c0_i32_0 : i32, i32
  }
  func.func @transform_13(%arg0: i32) -> (i32, i32) {
    %c0_i32 = arith.constant 0 : i32
    %c0_i32_0 = arith.constant 0 : i32
    %c0_i32_1 = arith.constant 0 : i32
    return %c0_i32, %c0_i32_0 : i32, i32
  }
  func.func @transform_14(%arg0: i32) -> (i32, i32) {
    %c0_i32 = arith.constant 0 : i32
    %c0_i32_0 = arith.constant 0 : i32
    %c0_i32_1 = arith.constant 0 : i32
    return %c0_i32, %c0_i32_0 : i32, i32
  }
  func.func @transform_15(%arg0: i32) -> (i32, i32) {
    %c0_i32 = arith.constant 0 : i32
    %c0_i32_0 = arith.constant 0 : i32
    %c0_i32_1 = arith.constant 0 : i32
    return %c0_i32, %c0_i32_0 : i32, i32
  }
  func.func @transform_16(%arg0: i32) -> (i32, i32) {
    %c0_i32 = arith.constant 0 : i32
    %c0_i32_0 = arith.constant 0 : i32
    %c0_i32_1 = arith.constant 0 : i32
    return %c0_i32, %c0_i32_0 : i32, i32
  }
  func.func @transform_17(%arg0: i32) -> (i32, i32, i32) {
    %c0_i32 = arith.constant 0 : i32
    %c0_i32_0 = arith.constant 0 : i32
    %c0_i32_1 = arith.constant 0 : i32
    return %arg0, %c0_i32, %c0_i32_0 : i32, i32, i32
  }
}

</mosaic_0001>

<llo_original>
// kernel: tpu_custom_call.1
$region0: #{tpu_custom_call.1}
  #allocation0 [shape = 'u32[]', space=smem, size = 0x4, offset = 0x4, fixed_abs, tag = 'smem constant byte address 0x4 - core index']
  #allocation1 [shape = 'u32[144,128]{1,0:T(1,128)}', space=vmem, size = 0x12000, scoped, tag = 'internal scratch']
  %s0 = inlined_call_operand.hbm [shape: f32[2,8,128], index: 0, kind: input, shape index: {}]
  %s1 = inlined_call_operand.hbm [shape: f32[128,128], index: 1, kind: input, shape index: {}]
  %s2 = inlined_call_operand.vmem [shape: f32[1,128], index: 2, kind: input, shape index: {}]
  %s3 = inlined_call_operand.hbm [shape: f32[128,128], index: 3, kind: input, shape index: {}]
  %s4 = inlined_call_operand.vmem [shape: f32[1,128], index: 4, kind: input, shape index: {}]
  %s5 = inlined_call_operand.hbm [shape: f32[128,128], index: 5, kind: input, shape index: {}]
  %s6 = inlined_call_operand.vmem [shape: f32[1,128], index: 6, kind: input, shape index: {}]
  %s7 = inlined_call_operand.hbm [shape: f32[4,32,128], index: 7, kind: input, shape index: {}]
  %s8 = inlined_call_operand.vmem [shape: f32[1,128], index: 8, kind: input, shape index: {}]
  %s9 = inlined_call_operand.vmem [shape: f32[1,128], index: 9, kind: input, shape index: {}]
  %s10 = inlined_call_operand.vmem [shape: f32[1,128], index: 10, kind: input, shape index: {}]
  %s11 = inlined_call_operand.hbm [shape: f32[128,256], index: 11, kind: input, shape index: {}]
  %s12 = inlined_call_operand.vmem [shape: f32[1,256], index: 12, kind: input, shape index: {}]
  %s13 = inlined_call_operand.hbm [shape: f32[256,128], index: 13, kind: input, shape index: {}]
  %s14 = inlined_call_operand.vmem [shape: f32[1,128], index: 14, kind: input, shape index: {}]
  %s15 = inlined_call_operand.vmem [shape: f32[1,128], index: 15, kind: input, shape index: {}]
  %s16 = inlined_call_operand.vmem [shape: f32[1,128], index: 16, kind: input, shape index: {}]
  %s17 = inlined_call_operand.hbm [shape: f32[2,8,128], index: 17, kind: output, shape index: {}]
  %s18 = sld [smem:[#allocation0]]
  $region129: #{tpu_custom_call.1} parent=0
    _
  %s20 = ssub.s32 1, %s18
  %s21 = scalar_select 0, %s20, %s18
  $region1: #{tpu_custom_call.1} parent=0
    #allocation2 [shape = 'u8[8192]{0}', space=vmem, size = 0x2000, scoped, tag = 'input window, operand 0']
    #allocation3 [shape = 's32[2]{0}', space=sflag, size = 0x8, scoped, tag = 'scoped memory for tpu_custom_call.1']
    #allocation4 [shape = 's32[2]{0}', space=sflag, size = 0x8, scoped, tag = 'scoped memory for tpu_custom_call.1']
    #allocation5 [shape = 'u8[65536]{0}', space=vmem, size = 0x10000, scoped, tag = 'input window, operand 1, single buffered']
    #allocation6 [shape = 's32[1]{0}', space=sflag, size = 0x4, scoped, tag = 'scoped memory for tpu_custom_call.1']
    #allocation7 [shape = 'u8[65536]{0}', space=vmem, size = 0x10000, scoped, tag = 'input window, operand 3, single buffered']
    #allocation8 [shape = 'u8[65536]{0}', space=vmem, size = 0x10000, scoped, tag = 'input window, operand 5, single buffered']
    #allocation9 [shape = 's32[1]{0}', space=sflag, size = 0x4, scoped, tag = 'scoped memory for tpu_custom_call.1']
    #allocation10 [shape = 'u8[65536]{0}', space=vmem, size = 0x10000, scoped, tag = 'input window, operand 7, single buffered']
    #allocation11 [shape = 'u8[131072]{0}', space=vmem, size = 0x20000, scoped, tag = 'input window, operand 11, single buffered']
    #allocation12 [shape = 's32[1]{0}', space=sflag, size = 0x4, scoped, tag = 'scoped memory for tpu_custom_call.1']
    #allocation13 [shape = 'u8[131072]{0}', space=vmem, size = 0x20000, scoped, tag = 'input window, operand 13, single buffered']
    #allocation14 [shape = 'u8[8192]{0}', space=vmem, size = 0x2000, scoped, tag = 'output window, operand 0']
    %22 = vsyncpa [#allocation3], 0
    %s23 = scalar_lea.sflag [#allocation3], 1
    %24 = vsyncpa %s23, 0
    %25 = vsyncpa [#allocation6], 0
    %26 = vsyncpa [#allocation9], 0
    %27 = vsyncpa [#allocation12], 0
    %28 = vsyncpa [#allocation4], 0
    %s29 = scalar_lea.sflag [#allocation4], 1
    %30 = vsyncpa %s29, 0
    loop: start=0, step=1, limit=4
    $region2: #{tpu_custom_call.1} parent=1 // loop_pre_header
      _
    $region3: #{tpu_custom_call.1} parent=1 // loop_header
      %s32 = sphi 0, %s36
      %p33 = scmp.ge.s32.totalorder %s32, 4
      %s42 = sphi 0, %s44
      %s45 = sphi 0, %s42
      %s46 = sphi 0, %s45
      %s62 = sphi 0, %s46
      %s66 = sphi 0, %s66
      %s68 = sphi 0, %s66
      %s69 = sphi 0, %s68
      %s83 = sphi 0, %s69
      %s87 = sphi 0, %s87
      %s89 = sphi 0, %s87
      %s90 = sphi 0, %s89
      %s104 = sphi 0, %s90
      %s108 = sphi 0, %s108
      %s110 = sphi 0, %s108
      %s111 = sphi 0, %s110
      %s125 = sphi 0, %s111
      %s129 = sphi 0, %s129
      %s131 = sphi 0, %s129
      %s132 = sphi 0, %s131
      %s146 = sphi 0, %s132
      %s150 = sphi 0, %s150
      %s152 = sphi 0, %s150
      %s153 = sphi 0, %s152
      %s167 = sphi 0, %s153
      %s171 = sphi 0, %s171
      %s173 = sphi 0, %s171
      %s174 = sphi 0, %s173
      %s188 = sphi 0, %s174
      %s192 = sphi 0, %s192
      %s194 = sphi 0, %s192
      %s195 = sphi 0, %s194
      %s209 = sphi 0, %s195
      %s213 = sphi 0, %s213
      %s215 = sphi 0, %s213
      %s216 = sphi 0, %s215
      %s230 = sphi 0, %s216
      %s234 = sphi 0, %s234
      %s236 = sphi 0, %s234
      %s237 = sphi 0, %s236
      %s251 = sphi 0, %s237
      %s255 = sphi 0, %s255
      %s257 = sphi 0, %s255
      %s258 = sphi 0, %s257
      %s272 = sphi 0, %s258
      %s276 = sphi 0, %s276
      %s278 = sphi 0, %s276
      %s279 = sphi 0, %s278
      %s293 = sphi 0, %s279
      %s297 = sphi 0, %s297
      %s299 = sphi 0, %s297
      %s300 = sphi 0, %s299
      %s314 = sphi 0, %s300
      %s318 = sphi 0, %s318
      %s320 = sphi 0, %s318
      %s321 = sphi 0, %s320
      %s335 = sphi 0, %s321
      %s339 = sphi 0, %s339
      %s341 = sphi 0, %s339
      %s342 = sphi 0, %s341
      %s356 = sphi 0, %s342
      %s360 = sphi 0, %s360
      %s362 = sphi 0, %s360
      %s363 = sphi 0, %s362
      %s377 = sphi 0, %s363
      %s381 = sphi 0, %s381
      %s383 = sphi 0, %s381
      %s384 = sphi 0, %s383
      %s398 = sphi 0, %s384
      %s404 = sphi 0, %s406
      %s407 = sphi 0, %s404
      %s408 = sphi 0, %s407
      %s424 = sphi 0, %s408
    $region4: #{tpu_custom_call.1} parent=1 // loop_header_branch
      %35 = sbr.rel (%p33) target = $region8
    $region5: #{tpu_custom_call.1} parent=1 // loop_body
      %s37 = ssub.s32 %s32, 1
      %s38 = ssub.s32 %s32, 2
      %s39 = sadd.s32 %s32, 1
      %s40 = ssub.s32 %s32, %s39
      %p41 = scmp.eq.s32.totalorder %s40, 0
      %s43 = sadd.s32 %s42, 1
      %s44 = scalar_select %p41, %s42, %s43
      %p47 = pneg %p41
      %p48 = scmp.eq.s32.totalorder %s32, 1
      %p49 = por %p47, %p48
      %p50 = scmp.ne.s32.totalorder %s42, %s45
      %p51 = scmp.eq.s32.totalorder %s32, 0
      %p52 = por %p50, %p51
      %p53 = scmp.ne.s32.totalorder %s42, %s45
      %p54 = scmp.eq.s32.totalorder %s37, 1
      %p55 = por %p53, %p54
      %p56 = scmp.ne.s32.totalorder %s45, %s46
      %p57 = scmp.eq.s32.totalorder %s37, 0
      %p58 = por %p56, %p57
      %p59 = scmp.ne.s32.totalorder %s45, %s46
      %p60 = scmp.eq.s32.totalorder %s38, 1
      %p61 = por %p59, %p60
      %p63 = scmp.ne.s32.totalorder %s46, %s62
      %p64 = scmp.eq.s32.totalorder %s38, 0
      %p65 = por %p63, %p64
      %s67 = sadd.s32 %s66, 1
      %p70 = scmp.eq.s32.totalorder %s32, 1
      %p71 = scmp.ne.s32.totalorder %s66, %s68
      %p72 = scmp.eq.s32.totalorder %s32, 0
      %p73 = por %p71, %p72
      %p74 = scmp.ne.s32.totalorder %s66, %s68
      %p75 = scmp.eq.s32.totalorder %s37, 1
      %p76 = por %p74, %p75
      %p77 = scmp.ne.s32.totalorder %s68, %s69
      %p78 = scmp.eq.s32.totalorder %s37, 0
      %p79 = por %p77, %p78
      %p80 = scmp.ne.s32.totalorder %s68, %s69
      %p81 = scmp.eq.s32.totalorder %s38, 1
      %p82 = por %p80, %p81
      %p84 = scmp.ne.s32.totalorder %s69, %s83
      %p85 = scmp.eq.s32.totalorder %s38, 0
      %p86 = por %p84, %p85
      %s88 = sadd.s32 %s87, 1
      %p91 = scmp.eq.s32.totalorder %s32, 1
      %p92 = scmp.ne.s32.totalorder %s87, %s89
      %p93 = scmp.eq.s32.totalorder %s32, 0
      %p94 = por %p92, %p93
      %p95 = scmp.ne.s32.totalorder %s87, %s89
      %p96 = scmp.eq.s32.totalorder %s37, 1
      %p97 = por %p95, %p96
      %p98 = scmp.ne.s32.totalorder %s89, %s90
      %p99 = scmp.eq.s32.totalorder %s37, 0
      %p100 = por %p98, %p99
      %p101 = scmp.ne.s32.totalorder %s89, %s90
      %p102 = scmp.eq.s32.totalorder %s38, 1
      %p103 = por %p101, %p102
      %p105 = scmp.ne.s32.totalorder %s90, %s104
      %p106 = scmp.eq.s32.totalorder %s38, 0
      %p107 = por %p105, %p106
      %s109 = sadd.s32 %s108, 1
      %p112 = scmp.eq.s32.totalorder %s32, 1
      %p113 = scmp.ne.s32.totalorder %s108, %s110
      %p114 = scmp.eq.s32.totalorder %s32, 0
      %p115 = por %p113, %p114
      %p116 = scmp.ne.s32.totalorder %s108, %s110
      %p117 = scmp.eq.s32.totalorder %s37, 1
      %p118 = por %p116, %p117
      %p119 = scmp.ne.s32.totalorder %s110, %s111
      %p120 = scmp.eq.s32.totalorder %s37, 0
      %p121 = por %p119, %p120
      %p122 = scmp.ne.s32.totalorder %s110, %s111
      %p123 = scmp.eq.s32.totalorder %s38, 1
      %p124 = por %p122, %p123
      %p126 = scmp.ne.s32.totalorder %s111, %s125
      %p127 = scmp.eq.s32.totalorder %s38, 0
      %p128 = por %p126, %p127
      %s130 = sadd.s32 %s129, 1
      %p133 = scmp.eq.s32.totalorder %s32, 1
      %p134 = scmp.ne.s32.totalorder %s129, %s131
      %p135 = scmp.eq.s32.totalorder %s32, 0
      %p136 = por %p134, %p135
      %p137 = scmp.ne.s32.totalorder %s129, %s131
      %p138 = scmp.eq.s32.totalorder %s37, 1
      %p139 = por %p137, %p138
      %p140 = scmp.ne.s32.totalorder %s131, %s132
      %p141 = scmp.eq.s32.totalorder %s37, 0
      %p142 = por %p140, %p141
      %p143 = scmp.ne.s32.totalorder %s131, %s132
      %p144 = scmp.eq.s32.totalorder %s38, 1
      %p145 = por %p143, %p144
      %p147 = scmp.ne.s32.totalorder %s132, %s146
      %p148 = scmp.eq.s32.totalorder %s38, 0
      %p149 = por %p147, %p148
      %s151 = sadd.s32 %s150, 1
      %p154 = scmp.eq.s32.totalorder %s32, 1
      %p155 = scmp.ne.s32.totalorder %s150, %s152
      %p156 = scmp.eq.s32.totalorder %s32, 0
      %p157 = por %p155, %p156
      %p158 = scmp.ne.s32.totalorder %s150, %s152
      %p159 = scmp.eq.s32.totalorder %s37, 1
      %p160 = por %p158, %p159
      %p161 = scmp.ne.s32.totalorder %s152, %s153
      %p162 = scmp.eq.s32.totalorder %s37, 0
      %p163 = por %p161, %p162
      %p164 = scmp.ne.s32.totalorder %s152, %s153
      %p165 = scmp.eq.s32.totalorder %s38, 1
      %p166 = por %p164, %p165
      %p168 = scmp.ne.s32.totalorder %s153, %s167
      %p169 = scmp.eq.s32.totalorder %s38, 0
      %p170 = por %p168, %p169
      %s172 = sadd.s32 %s171, 1
      %p175 = scmp.eq.s32.totalorder %s32, 1
      %p176 = scmp.ne.s32.totalorder %s171, %s173
      %p177 = scmp.eq.s32.totalorder %s32, 0
      %p178 = por %p176, %p177
      %p179 = scmp.ne.s32.totalorder %s171, %s173
      %p180 = scmp.eq.s32.totalorder %s37, 1
      %p181 = por %p179, %p180
      %p182 = scmp.ne.s32.totalorder %s173, %s174
      %p183 = scmp.eq.s32.totalorder %s37, 0
      %p184 = por %p182, %p183
      %p185 = scmp.ne.s32.totalorder %s173, %s174
      %p186 = scmp.eq.s32.totalorder %s38, 1
      %p187 = por %p185, %p186
      %p189 = scmp.ne.s32.totalorder %s174, %s188
      %p190 = scmp.eq.s32.totalorder %s38, 0
      %p191 = por %p189, %p190
      %s193 = sadd.s32 %s192, 1
      %p196 = scmp.eq.s32.totalorder %s32, 1
      %p197 = scmp.ne.s32.totalorder %s192, %s194
      %p198 = scmp.eq.s32.totalorder %s32, 0
      %p199 = por %p197, %p198
      %p200 = scmp.ne.s32.totalorder %s192, %s194
      %p201 = scmp.eq.s32.totalorder %s37, 1
      %p202 = por %p200, %p201
      %p203 = scmp.ne.s32.totalorder %s194, %s195
      %p204 = scmp.eq.s32.totalorder %s37, 0
      %p205 = por %p203, %p204
      %p206 = scmp.ne.s32.totalorder %s194, %s195
      %p207 = scmp.eq.s32.totalorder %s38, 1
      %p208 = por %p206, %p207
      %p210 = scmp.ne.s32.totalorder %s195, %s209
      %p211 = scmp.eq.s32.totalorder %s38, 0
      %p212 = por %p210, %p211
      %s214 = sadd.s32 %s213, 1
      %p217 = scmp.eq.s32.totalorder %s32, 1
      %p218 = scmp.ne.s32.totalorder %s213, %s215
      %p219 = scmp.eq.s32.totalorder %s32, 0
      %p220 = por %p218, %p219
      %p221 = scmp.ne.s32.totalorder %s213, %s215
      %p222 = scmp.eq.s32.totalorder %s37, 1
      %p223 = por %p221, %p222
      %p224 = scmp.ne.s32.totalorder %s215, %s216
      %p225 = scmp.eq.s32.totalorder %s37, 0
      %p226 = por %p224, %p225
      %p227 = scmp.ne.s32.totalorder %s215, %s216
      %p228 = scmp.eq.s32.totalorder %s38, 1
      %p229 = por %p227, %p228
      %p231 = scmp.ne.s32.totalorder %s216, %s230
      %p232 = scmp.eq.s32.totalorder %s38, 0
      %p233 = por %p231, %p232
      %s235 = sadd.s32 %s234, 1
      %p238 = scmp.eq.s32.totalorder %s32, 1
      %p239 = scmp.ne.s32.totalorder %s234, %s236
      %p240 = scmp.eq.s32.totalorder %s32, 0
      %p241 = por %p239, %p240
      %p242 = scmp.ne.s32.totalorder %s234, %s236
      %p243 = scmp.eq.s32.totalorder %s37, 1
      %p244 = por %p242, %p243
      %p245 = scmp.ne.s32.totalorder %s236, %s237
      %p246 = scmp.eq.s32.totalorder %s37, 0
      %p247 = por %p245, %p246
      %p248 = scmp.ne.s32.totalorder %s236, %s237
      %p249 = scmp.eq.s32.totalorder %s38, 1
      %p250 = por %p248, %p249
      %p252 = scmp.ne.s32.totalorder %s237, %s251
      %p253 = scmp.eq.s32.totalorder %s38, 0
      %p254 = por %p252, %p253
      %s256 = sadd.s32 %s255, 1
      %p259 = scmp.eq.s32.totalorder %s32, 1
      %p260 = scmp.ne.s32.totalorder %s255, %s257
      %p261 = scmp.eq.s32.totalorder %s32, 0
      %p262 = por %p260, %p261
      %p263 = scmp.ne.s32.totalorder %s255, %s257
      %p264 = scmp.eq.s32.totalorder %s37, 1
      %p265 = por %p263, %p264
      %p266 = scmp.ne.s32.totalorder %s257, %s258
      %p267 = scmp.eq.s32.totalorder %s37, 0
      %p268 = por %p266, %p267
      %p269 = scmp.ne.s32.totalorder %s257, %s258
      %p270 = scmp.eq.s32.totalorder %s38, 1
      %p271 = por %p269, %p270
      %p273 = scmp.ne.s32.totalorder %s258, %s272
      %p274 = scmp.eq.s32.totalorder %s38, 0
      %p275 = por %p273, %p274
      %s277 = sadd.s32 %s276, 1
      %p280 = scmp.eq.s32.totalorder %s32, 1
      %p281 = scmp.ne.s32.totalorder %s276, %s278
      %p282 = scmp.eq.s32.totalorder %s32, 0
      %p283 = por %p281, %p282
      %p284 = scmp.ne.s32.totalorder %s276, %s278
      %p285 = scmp.eq.s32.totalorder %s37, 1
      %p286 = por %p284, %p285
      %p287 = scmp.ne.s32.totalorder %s278, %s279
      %p288 = scmp.eq.s32.totalorder %s37, 0
      %p289 = por %p287, %p288
      %p290 = scmp.ne.s32.totalorder %s278, %s279
      %p291 = scmp.eq.s32.totalorder %s38, 1
      %p292 = por %p290, %p291
      %p294 = scmp.ne.s32.totalorder %s279, %s293
      %p295 = scmp.eq.s32.totalorder %s38, 0
      %p296 = por %p294, %p295
      %s298 = sadd.s32 %s297, 1
      %p301 = scmp.eq.s32.totalorder %s32, 1
      %p302 = scmp.ne.s32.totalorder %s297, %s299
      %p303 = scmp.eq.s32.totalorder %s32, 0
      %p304 = por %p302, %p303
      %p305 = scmp.ne.s32.totalorder %s297, %s299
      %p306 = scmp.eq.s32.totalorder %s37, 1
      %p307 = por %p305, %p306
      %p308 = scmp.ne.s32.totalorder %s299, %s300
      %p309 = scmp.eq.s32.totalorder %s37, 0
      %p310 = por %p308, %p309
      %p311 = scmp.ne.s32.totalorder %s299, %s300
      %p312 = scmp.eq.s32.totalorder %s38, 1
      %p313 = por %p311, %p312
      %p315 = scmp.ne.s32.totalorder %s300, %s314
      %p316 = scmp.eq.s32.totalorder %s38, 0
      %p317 = por %p315, %p316
      %s319 = sadd.s32 %s318, 1
      %p322 = scmp.eq.s32.totalorder %s32, 1
      %p323 = scmp.ne.s32.totalorder %s318, %s320
      %p324 = scmp.eq.s32.totalorder %s32, 0
      %p325 = por %p323, %p324
      %p326 = scmp.ne.s32.totalorder %s318, %s320
      %p327 = scmp.eq.s32.totalorder %s37, 1
      %p328 = por %p326, %p327
      %p329 = scmp.ne.s32.totalorder %s320, %s321
      %p330 = scmp.eq.s32.totalorder %s37, 0
      %p331 = por %p329, %p330
      %p332 = scmp.ne.s32.totalorder %s320, %s321
      %p333 = scmp.eq.s32.totalorder %s38, 1
      %p334 = por %p332, %p333
      %p336 = scmp.ne.s32.totalorder %s321, %s335
      %p337 = scmp.eq.s32.totalorder %s38, 0
      %p338 = por %p336, %p337
      %s340 = sadd.s32 %s339, 1
      %p343 = scmp.eq.s32.totalorder %s32, 1
      %p344 = scmp.ne.s32.totalorder %s339, %s341
      %p345 = scmp.eq.s32.totalorder %s32, 0
      %p346 = por %p344, %p345
      %p347 = scmp.ne.s32.totalorder %s339, %s341
      %p348 = scmp.eq.s32.totalorder %s37, 1
      %p349 = por %p347, %p348
      %p350 = scmp.ne.s32.totalorder %s341, %s342
      %p351 = scmp.eq.s32.totalorder %s37, 0
      %p352 = por %p350, %p351
      %p353 = scmp.ne.s32.totalorder %s341, %s342
      %p354 = scmp.eq.s32.totalorder %s38, 1
      %p355 = por %p353, %p354
      %p357 = scmp.ne.s32.totalorder %s342, %s356
      %p358 = scmp.eq.s32.totalorder %s38, 0
      %p359 = por %p357, %p358
      %s361 = sadd.s32 %s360, 1
      %p364 = scmp.eq.s32.totalorder %s32, 1
      %p365 = scmp.ne.s32.totalorder %s360, %s362
      %p366 = scmp.eq.s32.totalorder %s32, 0
      %p367 = por %p365, %p366
      %p368 = scmp.ne.s32.totalorder %s360, %s362
      %p369 = scmp.eq.s32.totalorder %s37, 1
      %p370 = por %p368, %p369
      %p371 = scmp.ne.s32.totalorder %s362, %s363
      %p372 = scmp.eq.s32.totalorder %s37, 0
      %p373 = por %p371, %p372
      %p374 = scmp.ne.s32.totalorder %s362, %s363
      %p375 = scmp.eq.s32.totalorder %s38, 1
      %p376 = por %p374, %p375
      %p378 = scmp.ne.s32.totalorder %s363, %s377
      %p379 = scmp.eq.s32.totalorder %s38, 0
      %p380 = por %p378, %p379
      %s382 = sadd.s32 %s381, 1
      %p385 = scmp.eq.s32.totalorder %s32, 1
      %p386 = scmp.ne.s32.totalorder %s381, %s383
      %p387 = scmp.eq.s32.totalorder %s32, 0
      %p388 = por %p386, %p387
      %p389 = scmp.ne.s32.totalorder %s381, %s383
      %p390 = scmp.eq.s32.totalorder %s37, 1
      %p391 = por %p389, %p390
      %p392 = scmp.ne.s32.totalorder %s383, %s384
      %p393 = scmp.eq.s32.totalorder %s37, 0
      %p394 = por %p392, %p393
      %p395 = scmp.ne.s32.totalorder %s383, %s384
      %p396 = scmp.eq.s32.totalorder %s38, 1
      %p397 = por %p395, %p396
      %p399 = scmp.ne.s32.totalorder %s384, %s398
      %p400 = scmp.eq.s32.totalorder %s38, 0
      %p401 = por %p399, %p400
      %s402 = ssub.s32 %s32, %s39
      %p403 = scmp.eq.s32.totalorder %s402, 0
      %s405 = sadd.s32 %s404, 1
      %s406 = scalar_select %p403, %s404, %s405
      %p409 = pneg %p403
      %p410 = scmp.eq.s32.totalorder %s32, 1
      %p411 = por %p409, %p410
      %p412 = scmp.ne.s32.totalorder %s404, %s407
      %p413 = scmp.eq.s32.totalorder %s32, 0
      %p414 = por %p412, %p413
      %p415 = scmp.ne.s32.totalorder %s404, %s407
      %p416 = scmp.eq.s32.totalorder %s37, 1
      %p417 = por %p415, %p416
      %p418 = scmp.ne.s32.totalorder %s407, %s408
      %p419 = scmp.eq.s32.totalorder %s37, 0
      %p420 = por %p418, %p419
      %p421 = scmp.ne.s32.totalorder %s407, %s408
      %p422 = scmp.eq.s32.totalorder %s38, 1
      %p423 = por %p421, %p422
      %p425 = scmp.ne.s32.totalorder %s408, %s424
      %p426 = scmp.eq.s32.totalorder %s38, 0
      %p427 = por %p425, %p426
      %p428 = scmp.le.s32.totalorder 1, %s32
      %p429 = scmp.lt.s32.totalorder %s32, 3
      %p430 = pnand %p428, %p429
      %p431 = pneg %p430
      // Predicated region
      $region9: #{tpu_custom_call.1} parent=5 // pred_check
        _
      $region10: #{tpu_custom_call.1} parent=5 // pred_check_branch
        %433 = sbr.rel (%p430) target = $region12
      $region11: #{tpu_custom_call.1} parent=5 // pred_region
        %s434 = ssub.s32 %s32, 1
        // Predicated region
        $region13: #{tpu_custom_call.1} parent=11 // pred_check
          %p435 = pneg %p79
        $region14: #{tpu_custom_call.1} parent=11 // pred_check_branch
          %437 = sbr.rel (%p435) target = $region16
        $region15: #{tpu_custom_call.1} parent=11 // pred_region
          %s439 = ssub.s32 2048, 2048
          %440 = vsyncadd [#allocation6], %s439
          %s441 = sshll.u32 [#allocation5], 4
          %s442 = int_to_ptr.vmem [resolvable:$true] %s441
          %447 = dma.hbm_to_vmem [thread:$0]  %s1, 2048, %s442, [#allocation6], 128, 128, 8
        $region16: #{tpu_custom_call.1} parent=11 // pred_fallthru
          _
        // Predicated region
        $region17: #{tpu_custom_call.1} parent=11 // pred_check
          %p448 = pneg %p100
        $region18: #{tpu_custom_call.1} parent=11 // pred_check_branch
          %450 = sbr.rel (%p448) target = $region20
        $region19: #{tpu_custom_call.1} parent=11 // pred_region
          _
        $region20: #{tpu_custom_call.1} parent=11 // pred_fallthru
          _
        // Predicated region
        $region21: #{tpu_custom_call.1} parent=11 // pred_check
          %p451 = pneg %p121
        $region22: #{tpu_custom_call.1} parent=11 // pred_check_branch
          %453 = sbr.rel (%p451) target = $region24
        $region23: #{tpu_custom_call.1} parent=11 // pred_region
          %s455 = ssub.s32 2048, 2048
          %456 = vsyncadd [#allocation6], %s455
          %s457 = sshll.u32 [#allocation7], 4
          %s458 = int_to_ptr.vmem [resolvable:$true] %s457
          %463 = dma.hbm_to_vmem [thread:$0]  %s3, 2048, %s458, [#allocation6], 128, 128, 8
        $region24: #{tpu_custom_call.1} parent=11 // pred_fallthru
          _
        // Predicated region
        $region25: #{tpu_custom_call.1} parent=11 // pred_check
          %p464 = pneg %p142
        $region26: #{tpu_custom_call.1} parent=11 // pred_check_branch
          %466 = sbr.rel (%p464) target = $region28
        $region27: #{tpu_custom_call.1} parent=11 // pred_region
          _
        $region28: #{tpu_custom_call.1} parent=11 // pred_fallthru
          _
        // Predicated region
        $region29: #{tpu_custom_call.1} parent=11 // pred_check
          %p467 = pneg %p163
        $region30: #{tpu_custom_call.1} parent=11 // pred_check_branch
          %469 = sbr.rel (%p467) target = $region32
        $region31: #{tpu_custom_call.1} parent=11 // pred_region
          %s471 = ssub.s32 2048, 2048
          %472 = vsyncadd [#allocation9], %s471
          %s473 = sshll.u32 [#allocation8], 4
          %s474 = int_to_ptr.vmem [resolvable:$true] %s473
          %479 = dma.hbm_to_vmem [thread:$0]  %s5, 2048, %s474, [#allocation9], 128, 128, 8
        $region32: #{tpu_custom_call.1} parent=11 // pred_fallthru
          _
        // Predicated region
        $region33: #{tpu_custom_call.1} parent=11 // pred_check
          %p480 = pneg %p184
        $region34: #{tpu_custom_call.1} parent=11 // pred_check_branch
          %482 = sbr.rel (%p480) target = $region36
        $region35: #{tpu_custom_call.1} parent=11 // pred_region
          _
        $region36: #{tpu_custom_call.1} parent=11 // pred_fallthru
          _
        // Predicated region
        $region37: #{tpu_custom_call.1} parent=11 // pred_check
          %p483 = pneg %p205
        $region38: #{tpu_custom_call.1} parent=11 // pred_check_branch
          %485 = sbr.rel (%p483) target = $region40
        $region39: #{tpu_custom_call.1} parent=11 // pred_region
          %s487 = ssub.s32 2048, 2048
          %488 = vsyncadd [#allocation9], %s487
          %s489 = sshll.u32 [#allocation10], 4
          %s490 = int_to_ptr.vmem [resolvable:$true] %s489
          %495 = dma.hbm_to_vmem [thread:$0]  %s7, 2048, %s490, [#allocation9], 128, 128, 8
        $region40: #{tpu_custom_call.1} parent=11 // pred_fallthru
          _
        // Predicated region
        $region41: #{tpu_custom_call.1} parent=11 // pred_check
          %p496 = pneg %p226
        $region42: #{tpu_custom_call.1} parent=11 // pred_check_branch
          %498 = sbr.rel (%p496) target = $region44
        $region43: #{tpu_custom_call.1} parent=11 // pred_region
          _
        $region44: #{tpu_custom_call.1} parent=11 // pred_fallthru
          _
        // Predicated region
        $region45: #{tpu_custom_call.1} parent=11 // pred_check
          %p499 = pneg %p247
        $region46: #{tpu_custom_call.1} parent=11 // pred_check_branch
          %501 = sbr.rel (%p499) target = $region48
        $region47: #{tpu_custom_call.1} parent=11 // pred_region
          _
        $region48: #{tpu_custom_call.1} parent=11 // pred_fallthru
          _
        // Predicated region
        $region49: #{tpu_custom_call.1} parent=11 // pred_check
          %p502 = pneg %p268
        $region50: #{tpu_custom_call.1} parent=11 // pred_check_branch
          %504 = sbr.rel (%p502) target = $region52
        $region51: #{tpu_custom_call.1} parent=11 // pred_region
          _
        $region52: #{tpu_custom_call.1} parent=11 // pred_fallthru
          _
        // Predicated region
        $region53: #{tpu_custom_call.1} parent=11 // pred_check
          %p505 = pneg %p289
        $region54: #{tpu_custom_call.1} parent=11 // pred_check_branch
          %507 = sbr.rel (%p505) target = $region56
        $region55: #{tpu_custom_call.1} parent=11 // pred_region
          %s509 = ssub.s32 4096, 4096
          %510 = vsyncadd [#allocation12], %s509
          %s511 = sshll.u32 [#allocation11], 4
          %s512 = int_to_ptr.vmem [resolvable:$true] %s511
          %517 = dma.hbm_to_vmem [thread:$0]  %s11, 4096, %s512, [#allocation12], 256, 256, 16
        $region56: #{tpu_custom_call.1} parent=11 // pred_fallthru
          _
        // Predicated region
        $region57: #{tpu_custom_call.1} parent=11 // pred_check
          %p518 = pneg %p310
        $region58: #{tpu_custom_call.1} parent=11 // pred_check_branch
          %520 = sbr.rel (%p518) target = $region60
        $region59: #{tpu_custom_call.1} parent=11 // pred_region
          _
        $region60: #{tpu_custom_call.1} parent=11 // pred_fallthru
          _
        // Predicated region
        $region61: #{tpu_custom_call.1} parent=11 // pred_check
          %p521 = pneg %p331
        $region62: #{tpu_custom_call.1} parent=11 // pred_check_branch
          %523 = sbr.rel (%p521) target = $region64
        $region63: #{tpu_custom_call.1} parent=11 // pred_region
          %s525 = ssub.s32 4096, 4096
          %526 = vsyncadd [#allocation12], %s525
          %s527 = sshll.u32 [#allocation13], 4
          %s528 = int_to_ptr.vmem [resolvable:$true] %s527
          %533 = dma.hbm_to_vmem [thread:$0]  %s13, 4096, %s528, [#allocation12], 128, 128, 8
        $region64: #{tpu_custom_call.1} parent=11 // pred_fallthru
          _
        // Predicated region
        $region65: #{tpu_custom_call.1} parent=11 // pred_check
          %p534 = pneg %p352
        $region66: #{tpu_custom_call.1} parent=11 // pred_check_branch
          %536 = sbr.rel (%p534) target = $region68
        $region67: #{tpu_custom_call.1} parent=11 // pred_region
          _
        $region68: #{tpu_custom_call.1} parent=11 // pred_fallthru
          _
        // Predicated region
        $region69: #{tpu_custom_call.1} parent=11 // pred_check
          %p537 = pneg %p373
        $region70: #{tpu_custom_call.1} parent=11 // pred_check_branch
          %539 = sbr.rel (%p537) target = $region72
        $region71: #{tpu_custom_call.1} parent=11 // pred_region
          _
        $region72: #{tpu_custom_call.1} parent=11 // pred_fallthru
          _
        // Predicated region
        $region73: #{tpu_custom_call.1} parent=11 // pred_check
          %p540 = pneg %p394
        $region74: #{tpu_custom_call.1} parent=11 // pred_check_branch
          %542 = sbr.rel (%p540) target = $region76
        $region75: #{tpu_custom_call.1} parent=11 // pred_region
          _
        $region76: #{tpu_custom_call.1} parent=11 // pred_fallthru
          _
      $region12: #{tpu_custom_call.1} parent=5 // pred_fallthru
        _
      %p543 = scmp.lt.s32.totalorder %s32, 2
      // Predicated region
      $region77: #{tpu_custom_call.1} parent=5 // pred_check
        %p544 = pneg %p543
      $region78: #{tpu_custom_call.1} parent=5 // pred_check_branch
        %546 = sbr.rel (%p544) target = $region80
      $region79: #{tpu_custom_call.1} parent=5 // pred_region
        // Predicated region
        $region81: #{tpu_custom_call.1} parent=79 // pred_check
          %p547 = pneg %p52
        $region82: #{tpu_custom_call.1} parent=79 // pred_check_branch
          %549 = sbr.rel (%p547) target = $region84
        $region83: #{tpu_custom_call.1} parent=79 // pred_region
          %s550 = sand.u32 %s42, 1
          %s551 = scalar_lea.sflag [#allocation3], %s550
          %s552 = sand.u32 %s42, 1
          %s553 = smul.addr %s552, 8
          %s554 = scalar_lea.vmem [#allocation2], %s553
          %s556 = ssub.s32 128, 128
          %557 = vsyncadd %s551, %s556
          %s558 = smul.addr %s32, 128
          %s559 = scalar_lea.hbm %s0, %s558
          %s561 = sshll.u32 %s554, 4
          %s562 = int_to_ptr.vmem [resolvable:$true] %s561
          %564 = dma.hbm_to_vmem [thread:$0]  %s559, 128, %s562, %s551
        $region84: #{tpu_custom_call.1} parent=79 // pred_fallthru
          _
      $region80: #{tpu_custom_call.1} parent=5 // pred_fallthru
        _
      %p565 = scmp.le.s32.totalorder 1, %s32
      %p566 = scmp.lt.s32.totalorder %s32, 3
      %p567 = pnand %p565, %p566
      %p568 = pneg %p567
      // Predicated region
      $region85: #{tpu_custom_call.1} parent=5 // pred_check
        _
      $region86: #{tpu_custom_call.1} parent=5 // pred_check_branch
        %570 = sbr.rel (%p567) target = $region88
      $region87: #{tpu_custom_call.1} parent=5 // pred_region
        %s571 = ssub.s32 %s32, 1
        %s572 = sand.u32 %s45, 1
        %s573 = scalar_lea.sflag [#allocation3], %s572
        %s574 = sand.u32 %s45, 1
        %s575 = smul.addr %s574, 8
        %s576 = scalar_lea.vmem [#allocation2], %s575
        // Predicated region
        $region89: #{tpu_custom_call.1} parent=87 // pred_check
          %p577 = pneg %p58
        $region90: #{tpu_custom_call.1} parent=87 // pred_check_branch
          %579 = sbr.rel (%p577) target = $region92
        $region91: #{tpu_custom_call.1} parent=87 // pred_region
          %580 = dma.done %s573, 128
        $region92: #{tpu_custom_call.1} parent=87 // pred_fallthru
          _
        // Predicated region
        $region93: #{tpu_custom_call.1} parent=87 // pred_check
          %p581 = pneg %p79
        $region94: #{tpu_custom_call.1} parent=87 // pred_check_branch
          %583 = sbr.rel (%p581) target = $region96
        $region95: #{tpu_custom_call.1} parent=87 // pred_region
          %584 = dma.done [#allocation6], 2048
        $region96: #{tpu_custom_call.1} parent=87 // pred_fallthru
          _
        // Predicated region
        $region97: #{tpu_custom_call.1} parent=87 // pred_check
          %p585 = pneg %p121
        $region98: #{tpu_custom_call.1} parent=87 // pred_check_branch
          %587 = sbr.rel (%p585) target = $region100
        $region99: #{tpu_custom_call.1} parent=87 // pred_region
          %588 = dma.done [#allocation6], 2048
        $region100: #{tpu_custom_call.1} parent=87 // pred_fallthru
          _
        // Predicated region
        $region101: #{tpu_custom_call.1} parent=87 // pred_check
          %p589 = pneg %p163
        $region102: #{tpu_custom_call.1} parent=87 // pred_check_branch
          %591 = sbr.rel (%p589) target = $region104
        $region103: #{tpu_custom_call.1} parent=87 // pred_region
          %592 = dma.done [#allocation9], 2048
        $region104: #{tpu_custom_call.1} parent=87 // pred_fallthru
          _
        // Predicated region
        $region105: #{tpu_custom_call.1} parent=87 // pred_check
          %p593 = pneg %p205
        $region106: #{tpu_custom_call.1} parent=87 // pred_check_branch
          %595 = sbr.rel (%p593) target = $region108
        $region107: #{tpu_custom_call.1} parent=87 // pred_region
          %596 = dma.done [#allocation9], 2048
        $region108: #{tpu_custom_call.1} parent=87 // pred_fallthru
          _
        // Predicated region
        $region109: #{tpu_custom_call.1} parent=87 // pred_check
          %p597 = pneg %p289
        $region110: #{tpu_custom_call.1} parent=87 // pred_check_branch
          %599 = sbr.rel (%p597) target = $region112
        $region111: #{tpu_custom_call.1} parent=87 // pred_region
          %600 = dma.done [#allocation12], 4096
        $region112: #{tpu_custom_call.1} parent=87 // pred_fallthru
          _
        // Predicated region
        $region113: #{tpu_custom_call.1} parent=87 // pred_check
          %p601 = pneg %p331
        $region114: #{tpu_custom_call.1} parent=87 // pred_check_branch
          %603 = sbr.rel (%p601) target = $region116
        $region115: #{tpu_custom_call.1} parent=87 // pred_region
          %604 = dma.done [#allocation12], 4096
        $region116: #{tpu_custom_call.1} parent=87 // pred_fallthru
          _
        %s605 = sand.u32 %s45, 1
        %s606 = scalar_lea.sflag [#allocation3], %s605
        %s607 = sand.u32 %s45, 1
        %s608 = smul.addr %s607, 8
        %s609 = scalar_lea.vmem [#allocation2], %s608
        %p610 = pneg %p58
        %p611 = pneg %p55
        %p612 = pneg %p79
        %p613 = pneg %p76
        %p614 = pneg %p100
        %p615 = pneg %p97
        %p616 = pneg %p121
        %p617 = pneg %p118
        %p618 = pneg %p142
        %p619 = pneg %p139
        %p620 = pneg %p163
        %p621 = pneg %p160
        %p622 = pneg %p184
        %p623 = pneg %p181
        %p624 = pneg %p205
        %p625 = pneg %p202
        %p626 = pneg %p226
        %p627 = pneg %p223
        %p628 = pneg %p247
        %p629 = pneg %p244
        %p630 = pneg %p268
        %p631 = pneg %p265
        %p632 = pneg %p289
        %p633 = pneg %p286
        %p634 = pneg %p310
        %p635 = pneg %p307
        %p636 = pneg %p331
        %p637 = pneg %p328
        %p638 = pneg %p352
        %p639 = pneg %p349
        %p640 = pneg %p373
        %p641 = pneg %p370
        %p642 = pneg %p394
        %p643 = pneg %p391
        %p644 = pneg %p420
        %p645 = pneg %p417
        %s646 = sand.u32 %s407, 1
        %s647 = scalar_lea.sflag [#allocation4], %s646
        %s648 = sand.u32 %s407, 1
        %s649 = smul.addr %s648, 8
        %s650 = scalar_lea.vmem [#allocation14], %s649
        %v652 = vld [vmem:[#allocation5] sm:$0xff]
        %v653 = vld [vmem:[#allocation5 + $0x8] sm:$0xff]
        %v654 = vld [vmem:[#allocation5 + $0x10] sm:$0xff]
        %v655 = vld [vmem:[#allocation5 + $0x18] sm:$0xff]
        %v656 = vld [vmem:[#allocation5 + $0x20] sm:$0xff]
        %v657 = vld [vmem:[#allocation5 + $0x28] sm:$0xff]
        %v658 = vld [vmem:[#allocation5 + $0x30] sm:$0xff]
        %v659 = vld [vmem:[#allocation5 + $0x38] sm:$0xff]
        %v660 = vld [vmem:[#allocation5 + $0x40] sm:$0xff]
        %v661 = vld [vmem:[#allocation5 + $0x48] sm:$0xff]
        %v662 = vld [vmem:[#allocation5 + $0x50] sm:$0xff]
        %v663 = vld [vmem:[#allocation5 + $0x58] sm:$0xff]
        %v664 = vld [vmem:[#allocation5 + $0x60] sm:$0xff]
        %v665 = vld [vmem:[#allocation5 + $0x68] sm:$0xff]
        %v666 = vld [vmem:[#allocation5 + $0x70] sm:$0xff]
        %v667 = vld [vmem:[#allocation5 + $0x78] sm:$0xff]
        %v668 = vld [vmem:[%s2] sm:$0x1]
        %v669 = vld [vmem:[#allocation7] sm:$0xff]
        %v670 = vld [vmem:[#allocation7 + $0x8] sm:$0xff]
        %v671 = vld [vmem:[#allocation7 + $0x10] sm:$0xff]
        %v672 = vld [vmem:[#allocation7 + $0x18] sm:$0xff]
        %v673 = vld [vmem:[#allocation7 + $0x20] sm:$0xff]
        %v674 = vld [vmem:[#allocation7 + $0x28] sm:$0xff]
        %v675 = vld [vmem:[#allocation7 + $0x30] sm:$0xff]
        %v676 = vld [vmem:[#allocation7 + $0x38] sm:$0xff]
        %v677 = vld [vmem:[#allocation7 + $0x40] sm:$0xff]
        %v678 = vld [vmem:[#allocation7 + $0x48] sm:$0xff]
        %v679 = vld [vmem:[#allocation7 + $0x50] sm:$0xff]
        %v680 = vld [vmem:[#allocation7 + $0x58] sm:$0xff]
        %v681 = vld [vmem:[#allocation7 + $0x60] sm:$0xff]
        %v682 = vld [vmem:[#allocation7 + $0x68] sm:$0xff]
        %v683 = vld [vmem:[#allocation7 + $0x70] sm:$0xff]
        %v684 = vld [vmem:[#allocation7 + $0x78] sm:$0xff]
        %v685 = vld [vmem:[%s4] sm:$0x1]
        %v686 = vld [vmem:[#allocation8] sm:$0xff]
        %v687 = vld [vmem:[#allocation8 + $0x8] sm:$0xff]
        %v688 = vld [vmem:[#allocation8 + $0x10] sm:$0xff]
        %v689 = vld [vmem:[#allocation8 + $0x18] sm:$0xff]
        %v690 = vld [vmem:[#allocation8 + $0x20] sm:$0xff]
        %v691 = vld [vmem:[#allocation8 + $0x28] sm:$0xff]
        %v692 = vld [vmem:[#allocation8 + $0x30] sm:$0xff]
        %v693 = vld [vmem:[#allocation8 + $0x38] sm:$0xff]
        %v694 = vld [vmem:[#allocation8 + $0x40] sm:$0xff]
        %v695 = vld [vmem:[#allocation8 + $0x48] sm:$0xff]
        %v696 = vld [vmem:[#allocation8 + $0x50] sm:$0xff]
        %v697 = vld [vmem:[#allocation8 + $0x58] sm:$0xff]
        %v698 = vld [vmem:[#allocation8 + $0x60] sm:$0xff]
        %v699 = vld [vmem:[#allocation8 + $0x68] sm:$0xff]
        %v700 = vld [vmem:[#allocation8 + $0x70] sm:$0xff]
        %v701 = vld [vmem:[#allocation8 + $0x78] sm:$0xff]
        %v702 = vld [vmem:[%s6] sm:$0x1]
        %v703 = vld [vmem:[#allocation10] sm:$0xff]
        %v704 = vld [vmem:[#allocation10 + $0x8] sm:$0xff]
        %v705 = vld [vmem:[#allocation10 + $0x10] sm:$0xff]
        %v706 = vld [vmem:[#allocation10 + $0x18] sm:$0xff]
        %v707 = vld [vmem:[#allocation10 + $0x20] sm:$0xff]
        %v708 = vld [vmem:[#allocation10 + $0x28] sm:$0xff]
        %v709 = vld [vmem:[#allocation10 + $0x30] sm:$0xff]
        %v710 = vld [vmem:[#allocation10 + $0x38] sm:$0xff]
        %v711 = vld [vmem:[#allocation10 + $0x40] sm:$0xff]
        %v712 = vld [vmem:[#allocation10 + $0x48] sm:$0xff]
        %v713 = vld [vmem:[#allocation10 + $0x50] sm:$0xff]
        %v714 = vld [vmem:[#allocation10 + $0x58] sm:$0xff]
        %v715 = vld [vmem:[#allocation10 + $0x60] sm:$0xff]
        %v716 = vld [vmem:[#allocation10 + $0x68] sm:$0xff]
        %v717 = vld [vmem:[#allocation10 + $0x70] sm:$0xff]
        %v718 = vld [vmem:[#allocation10 + $0x78] sm:$0xff]
        %v719 = vld [vmem:[%s8] sm:$0x1]
        %v720 = vld [vmem:[%s9] sm:$0x1]
        %v721 = vld [vmem:[%s10] sm:$0x1]
        %v722 = vld [vmem:[#allocation11] sm:$0xff]
        %v723 = vld [vmem:[#allocation11 + $0x8] sm:$0xff]
        %v724 = vld [vmem:[#allocation11 + $0x10] sm:$0xff]
        %v725 = vld [vmem:[#allocation11 + $0x18] sm:$0xff]
        %v726 = vld [vmem:[#allocation11 + $0x20] sm:$0xff]
        %v727 = vld [vmem:[#allocation11 + $0x28] sm:$0xff]
        %v728 = vld [vmem:[#allocation11 + $0x30] sm:$0xff]
        %v729 = vld [vmem:[#allocation11 + $0x38] sm:$0xff]
        %v730 = vld [vmem:[#allocation11 + $0x40] sm:$0xff]
        %v731 = vld [vmem:[#allocation11 + $0x48] sm:$0xff]
        %v732 = vld [vmem:[#allocation11 + $0x50] sm:$0xff]
        %v733 = vld [vmem:[#allocation11 + $0x58] sm:$0xff]
        %v734 = vld [vmem:[#allocation11 + $0x60] sm:$0xff]
        %v735 = vld [vmem:[#allocation11 + $0x68] sm:$0xff]
        %v736 = vld [vmem:[#allocation11 + $0x70] sm:$0xff]
        %v737 = vld [vmem:[#allocation11 + $0x78] sm:$0xff]
        %v738 = vld [vmem:[#allocation11 + $0x80] sm:$0xff]
        %v739 = vld [vmem:[#allocation11 + $0x88] sm:$0xff]
        %v740 = vld [vmem:[#allocation11 + $0x90] sm:$0xff]
        %v741 = vld [vmem:[#allocation11 + $0x98] sm:$0xff]
        %v742 = vld [vmem:[#allocation11 + $0xa0] sm:$0xff]
        %v743 = vld [vmem:[#allocation11 + $0xa8] sm:$0xff]
        %v744 = vld [vmem:[#allocation11 + $0xb0] sm:$0xff]
        %v745 = vld [vmem:[#allocation11 + $0xb8] sm:$0xff]
        %v746 = vld [vmem:[#allocation11 + $0xc0] sm:$0xff]
        %v747 = vld [vmem:[#allocation11 + $0xc8] sm:$0xff]
        %v748 = vld [vmem:[#allocation11 + $0xd0] sm:$0xff]
        %v749 = vld [vmem:[#allocation11 + $0xd8] sm:$0xff]
        %v750 = vld [vmem:[#allocation11 + $0xe0] sm:$0xff]
        %v751 = vld [vmem:[#allocation11 + $0xe8] sm:$0xff]
        %v752 = vld [vmem:[#allocation11 + $0xf0] sm:$0xff]
        %v753 = vld [vmem:[#allocation11 + $0xf8] sm:$0xff]
        %v754 = vld [vmem:[%s12] sm:$0x3]
        %v755 = vld [vmem:[#allocation13] sm:$0xff]
        %v756 = vld [vmem:[#allocation13 + $0x8] sm:$0xff]
        %v757 = vld [vmem:[#allocation13 + $0x10] sm:$0xff]
        %v758 = vld [vmem:[#allocation13 + $0x18] sm:$0xff]
        %v759 = vld [vmem:[#allocation13 + $0x20] sm:$0xff]
        %v760 = vld [vmem:[#allocation13 + $0x28] sm:$0xff]
        %v761 = vld [vmem:[#allocation13 + $0x30] sm:$0xff]
        %v762 = vld [vmem:[#allocation13 + $0x38] sm:$0xff]
        %v763 = vld [vmem:[#allocation13 + $0x40] sm:$0xff]
        %v764 = vld [vmem:[#allocation13 + $0x48] sm:$0xff]
        %v765 = vld [vmem:[#allocation13 + $0x50] sm:$0xff]
        %v766 = vld [vmem:[#allocation13 + $0x58] sm:$0xff]
        %v767 = vld [vmem:[#allocation13 + $0x60] sm:$0xff]
        %v768 = vld [vmem:[#allocation13 + $0x68] sm:$0xff]
        %v769 = vld [vmem:[#allocation13 + $0x70] sm:$0xff]
        %v770 = vld [vmem:[#allocation13 + $0x78] sm:$0xff]
        %v771 = vld [vmem:[#allocation13 + $0x80] sm:$0xff]
        %v772 = vld [vmem:[#allocation13 + $0x88] sm:$0xff]
        %v773 = vld [vmem:[#allocation13 + $0x90] sm:$0xff]
        %v774 = vld [vmem:[#allocation13 + $0x98] sm:$0xff]
        %v775 = vld [vmem:[#allocation13 + $0xa0] sm:$0xff]
        %v776 = vld [vmem:[#allocation13 + $0xa8] sm:$0xff]
        %v777 = vld [vmem:[#allocation13 + $0xb0] sm:$0xff]
        %v778 = vld [vmem:[#allocation13 + $0xb8] sm:$0xff]
        %v779 = vld [vmem:[#allocation13 + $0xc0] sm:$0xff]
        %v780 = vld [vmem:[#allocation13 + $0xc8] sm:$0xff]
        %v781 = vld [vmem:[#allocation13 + $0xd0] sm:$0xff]
        %v782 = vld [vmem:[#allocation13 + $0xd8] sm:$0xff]
        %v783 = vld [vmem:[#allocation13 + $0xe0] sm:$0xff]
        %v784 = vld [vmem:[#allocation13 + $0xe8] sm:$0xff]
        %v785 = vld [vmem:[#allocation13 + $0xf0] sm:$0xff]
        %v786 = vld [vmem:[#allocation13 + $0xf8] sm:$0xff]
        %v787 = vld [vmem:[%s14] sm:$0x1]
        %v788 = vld [vmem:[%s15] sm:$0x1]
        %v789 = vld [vmem:[%s16] sm:$0x1]
        %v790 = vld [vmem:[%s576] sm:$0xff]
        %v791 = vpack.c.bf16 %v790, %v790
        %v792 = vpack.c.bf16 %v653, %v652
        %v793 = vpack.c.bf16 %v655, %v654
        %v794 = vpack.c.bf16 %v657, %v656
        %v795 = vpack.c.bf16 %v659, %v658
        %v796 = vpack.c.bf16 %v661, %v660
        %v797 = vpack.c.bf16 %v663, %v662
        %v798 = vpack.c.bf16 %v665, %v664
        %v799 = vpack.c.bf16 %v667, %v666
        %v801 = vlaneseq
        %v802 = vshrl.u32 %v801, 7
        %v803 = vsub.s32 0, %v802
        %v804 = vrot.slane %v668, %v803
        %806 = vmatprep.subr.bf16.mxu0 0
        %807 = vmatpush1.bf16.msra.mxu0 %v799
        %808 = vmatprep.subr.bf16.mxu0 0
        %809 = vmatpush1.bf16.msra.mxu0 %v798
        %810 = vmatprep.subr.bf16.mxu0 0
        %811 = vmatpush1.bf16.msra.mxu0 %v797
        %812 = vmatprep.subr.bf16.mxu0 0
        %813 = vmatpush1.bf16.msra.mxu0 %v796
        %814 = vmatprep.subr.bf16.mxu0 0
        %815 = vmatpush1.bf16.msra.mxu0 %v795
        %816 = vmatprep.subr.bf16.mxu0 0
        %817 = vmatpush1.bf16.msra.mxu0 %v794
        %818 = vmatprep.subr.bf16.mxu0 0
        %819 = vmatpush1.bf16.msra.mxu0 %v793
        %820 = vmatprep.subr.bf16.mxu0 0
        %821 = vmatpush1.bf16.msra.mxu0 %v792
        %822 = vmatprep.subr.bf16.mxu0 0
        %823 = vmatpush2.bf16.msra.mxu0 0
        %824 = vmatprep.subr.bf16.mxu0 0
        %825 = vmatpush2.bf16.msra.mxu0 0
        %826 = vmatprep.subr.bf16.mxu0 0
        %827 = vmatpush2.bf16.msra.mxu0 0
        %828 = vmatprep.subr.bf16.mxu0 0
        %829 = vmatpush2.bf16.msra.mxu0 0
        %830 = vmatprep.subr.bf16.mxu0 0
        %831 = vmatpush2.bf16.msra.mxu0 0
        %832 = vmatprep.subr.bf16.mxu0 0
        %833 = vmatpush2.bf16.msra.mxu0 0
        %834 = vmatprep.subr.bf16.mxu0 0
        %835 = vmatpush2.bf16.msra.mxu0 0
        %836 = vmatprep.subr.bf16.mxu0 0
        %837 = vmatpush2.bf16.msra.mxu0 0
        %838 = vmatprep.mubr.bf16.mxu0 0
        %839 = vmatmul.mubr.bf16.gmra.mxu0 %v791
        %v840 = vpop.f32.mrf.mxu0
        %v841 = vadd.f32 %v804, %v840
        %v842 = vpop.f32.mrf.mxu0
        %v843 = vpop.f32.mrf.mxu0
        %v844 = vpop.f32.mrf.mxu0
        %845 = vdwg.mxu0
        %v846 = vpack.c.bf16 %v670, %v669
        %v847 = vpack.c.bf16 %v672, %v671
        %v848 = vpack.c.bf16 %v674, %v673
        %v849 = vpack.c.bf16 %v676, %v675
        %v850 = vpack.c.bf16 %v678, %v677
        %v851 = vpack.c.bf16 %v680, %v679
        %v852 = vpack.c.bf16 %v682, %v681
        %v853 = vpack.c.bf16 %v684, %v683
        %v855 = vlaneseq
        %v856 = vshrl.u32 %v855, 7
        %v857 = vsub.s32 0, %v856
        %v858 = vrot.slane %v685, %v857
        %860 = vmatprep.subr.bf16.mxu0 0
        %861 = vmatpush1.bf16.msra.mxu0 %v853
        %862 = vmatprep.subr.bf16.mxu0 0
        %863 = vmatpush1.bf16.msra.mxu0 %v852
        %864 = vmatprep.subr.bf16.mxu0 0
        %865 = vmatpush1.bf16.msra.mxu0 %v851
        %866 = vmatprep.subr.bf16.mxu0 0
        %867 = vmatpush1.bf16.msra.mxu0 %v850
        %868 = vmatprep.subr.bf16.mxu0 0
        %869 = vmatpush1.bf16.msra.mxu0 %v849
        %870 = vmatprep.subr.bf16.mxu0 0
        %871 = vmatpush1.bf16.msra.mxu0 %v848
        %872 = vmatprep.subr.bf16.mxu0 0
        %873 = vmatpush1.bf16.msra.mxu0 %v847
        %874 = vmatprep.subr.bf16.mxu0 0
        %875 = vmatpush1.bf16.msra.mxu0 %v846
        %876 = vmatprep.subr.bf16.mxu0 0
        %877 = vmatpush2.bf16.msra.mxu0 0
        %878 = vmatprep.subr.bf16.mxu0 0
        %879 = vmatpush2.bf16.msra.mxu0 0
        %880 = vmatprep.subr.bf16.mxu0 0
        %881 = vmatpush2.bf16.msra.mxu0 0
        %882 = vmatprep.subr.bf16.mxu0 0
        %883 = vmatpush2.bf16.msra.mxu0 0
        %884 = vmatprep.subr.bf16.mxu0 0
        %885 = vmatpush2.bf16.msra.mxu0 0
        %886 = vmatprep.subr.bf16.mxu0 0
        %887 = vmatpush2.bf16.msra.mxu0 0
        %888 = vmatprep.subr.bf16.mxu0 0
        %889 = vmatpush2.bf16.msra.mxu0 0
        %890 = vmatprep.subr.bf16.mxu0 0
        %891 = vmatpush2.bf16.msra.mxu0 0
        %892 = vmatprep.mubr.bf16.mxu0 0
        %893 = vmatmul.mubr.bf16.gmra.mxu0 %v791
        %v894 = vpop.f32.mrf.mxu0
        %v895 = vadd.f32 %v858, %v894
        %v896 = vpop.f32.mrf.mxu0
        %v897 = vpop.f32.mrf.mxu0
        %v898 = vpop.f32.mrf.mxu0
        %899 = vdwg.mxu0
        %v900 = vpack.c.bf16 %v687, %v686
        %v901 = vpack.c.bf16 %v689, %v688
        %v902 = vpack.c.bf16 %v691, %v690
        %v903 = vpack.c.bf16 %v693, %v692
        %v904 = vpack.c.bf16 %v695, %v694
        %v905 = vpack.c.bf16 %v697, %v696
        %v906 = vpack.c.bf16 %v699, %v698
        %v907 = vpack.c.bf16 %v701, %v700
        %v909 = vlaneseq
        %v910 = vshrl.u32 %v909, 7
        %v911 = vsub.s32 0, %v910
        %v912 = vrot.slane %v702, %v911
        %914 = vmatprep.subr.bf16.mxu0 0
        %915 = vmatpush1.bf16.msra.mxu0 %v907
        %916 = vmatprep.subr.bf16.mxu0 0
        %917 = vmatpush1.bf16.msra.mxu0 %v906
        %918 = vmatprep.subr.bf16.mxu0 0
        %919 = vmatpush1.bf16.msra.mxu0 %v905
        %920 = vmatprep.subr.bf16.mxu0 0
        %921 = vmatpush1.bf16.msra.mxu0 %v904
        %922 = vmatprep.subr.bf16.mxu0 0
        %923 = vmatpush1.bf16.msra.mxu0 %v903
        %924 = vmatprep.subr.bf16.mxu0 0
        %925 = vmatpush1.bf16.msra.mxu0 %v902
        %926 = vmatprep.subr.bf16.mxu0 0
        %927 = vmatpush1.bf16.msra.mxu0 %v901
        %928 = vmatprep.subr.bf16.mxu0 0
        %929 = vmatpush1.bf16.msra.mxu0 %v900
        %930 = vmatprep.subr.bf16.mxu0 0
        %931 = vmatpush2.bf16.msra.mxu0 0
        %932 = vmatprep.subr.bf16.mxu0 0
        %933 = vmatpush2.bf16.msra.mxu0 0
        %934 = vmatprep.subr.bf16.mxu0 0
        %935 = vmatpush2.bf16.msra.mxu0 0
        %936 = vmatprep.subr.bf16.mxu0 0
        %937 = vmatpush2.bf16.msra.mxu0 0
        %938 = vmatprep.subr.bf16.mxu0 0
        %939 = vmatpush2.bf16.msra.mxu0 0
        %940 = vmatprep.subr.bf16.mxu0 0
        %941 = vmatpush2.bf16.msra.mxu0 0
        %942 = vmatprep.subr.bf16.mxu0 0
        %943 = vmatpush2.bf16.msra.mxu0 0
        %944 = vmatprep.subr.bf16.mxu0 0
        %945 = vmatpush2.bf16.msra.mxu0 0
        %946 = vmatprep.mubr.bf16.mxu0 0
        %947 = vmatmul.mubr.bf16.gmra.mxu0 %v791
        %v948 = vpop.f32.mrf.mxu0
        %v949 = vadd.f32 %v912, %v948
        %v950 = vpop.f32.mrf.mxu0
        %v951 = vpop.f32.mrf.mxu0
        %v952 = vpop.f32.mrf.mxu0
        %953 = vdwg.mxu0
        %v954 = vmul.f32 %v841, 0.17677669
        %v955 = vpack.c.bf16 %v954, %v954
        %v956 = vpack.c.bf16 %v895, %v895
        %v957 = vpack.c.bf16 %v949, %v949
        %v958 = vpack.c.bf16 %v704, %v703
        %v959 = vpack.c.bf16 %v706, %v705
        %v960 = vpack.c.bf16 %v708, %v707
        %v961 = vpack.c.bf16 %v710, %v709
        %v962 = vpack.c.bf16 %v712, %v711
        %v963 = vpack.c.bf16 %v714, %v713
        %v964 = vpack.c.bf16 %v716, %v715
        %v965 = vpack.c.bf16 %v718, %v717
        %vm966 = vcmask 261120
        %v968 = vsel %vm966, %v955, 0
        %v971 = vsel %vm966, %v956, 0
        %973 = vmatprep.subr.bf16.mxu0 0
        %974 = vmatpush1.bf16.xpose.msra.mxu0 0
        %975 = vmatprep.subr.bf16.mxu0 0
        %976 = vmatpush1.bf16.xpose.msra.mxu0 0
        %977 = vmatprep.subr.bf16.mxu0 0
        %978 = vmatpush1.bf16.xpose.msra.mxu0 0
        %979 = vmatprep.subr.bf16.mxu0 0
        %980 = vmatpush1.bf16.xpose.msra.mxu0 0
        %981 = vmatprep.subr.bf16.mxu0 0
        %982 = vmatpush1.bf16.xpose.msra.mxu0 0
        %983 = vmatprep.subr.bf16.mxu0 0
        %984 = vmatpush1.bf16.xpose.msra.mxu0 0
        %985 = vmatprep.subr.bf16.mxu0 0
        %986 = vmatpush1.bf16.xpose.msra.mxu0 0
        %987 = vmatprep.subr.bf16.mxu0 0
        %988 = vmatpush1.bf16.xpose.msra.mxu0 %v971
        %989 = vmatprep.subr.bf16.mxu0 0
        %990 = vmatpush2.bf16.xpose.msra.mxu0 0
        %991 = vmatprep.subr.bf16.mxu0 0
        %992 = vmatpush2.bf16.xpose.msra.mxu0 0
        %993 = vmatprep.subr.bf16.mxu0 0
        %994 = vmatpush2.bf16.xpose.msra.mxu0 0
        %995 = vmatprep.subr.bf16.mxu0 0
        %996 = vmatpush2.bf16.xpose.msra.mxu0 0
        %997 = vmatprep.subr.bf16.mxu0 0
        %998 = vmatpush2.bf16.xpose.msra.mxu0 0
        %999 = vmatprep.subr.bf16.mxu0 0
        %1000 = vmatpush2.bf16.xpose.msra.mxu0 0
        %1001 = vmatprep.subr.bf16.mxu0 0
        %1002 = vmatpush2.bf16.xpose.msra.mxu0 0
        %1003 = vmatprep.subr.bf16.mxu0 0
        %1004 = vmatpush2.bf16.xpose.msra.mxu0 0
        %1005 = vmatprep.mubr.bf16.mxu0 0
        %1006 = vmatmul.mubr.bf16.gmra.mxu0 %v968
        %v1007 = vpop.f32.mrf.mxu0
        %v1008 = vadd.f32 0.0, %v1007
        %v1009 = vpop.f32.mrf.mxu0
        %v1010 = vpop.f32.mrf.mxu0
        %v1011 = vpop.f32.mrf.mxu0
        %1012 = vdwg.mxu0
        %vm1013 = vcmask 64512
        %v1014 = vsel %vm1013, %v1008, -inf
        %1015 = vmax.xlane.f32.xlu0 %v1014
        %v1016 = vpop.xlane.xlu0 %1015
        %v1017 = vsub.f32 %v1008, %v1016
        %v1018 = vmul.f32 %v1017, 1.442695
        %v1019 = vpow.pop %v1018
        %v1020 = vsel %vm1013, %v1019, 0.0
        %1021 = vadd.xlane.f32.xlu0 %v1020
        %v1022 = vpop.xlane.xlu0 %1021
        %v1023 = vrcp.pop %v1022
        %v1024 = vmul.f32 %v1019, %v1023
        %v1025 = vpack.c.bf16 %v1024, %v1024
        %v1027 = vsel %vm1013, %v1025, 0
        %vm1029 = vcmask 1043456
        %v1031 = vsel %vm1029, %v957, 0
        %1033 = vmatprep.subr.bf16.mxu0 0
        %1034 = vmatpush1.bf16.msra.mxu0 0
        %1035 = vmatprep.subr.bf16.mxu0 0
        %1036 = vmatpush1.bf16.msra.mxu0 0
        %1037 = vmatprep.subr.bf16.mxu0 0
        %1038 = vmatpush1.bf16.msra.mxu0 0
        %1039 = vmatprep.subr.bf16.mxu0 0
        %1040 = vmatpush1.bf16.msra.mxu0 0
        %1041 = vmatprep.subr.bf16.mxu0 0
        %1042 = vmatpush1.bf16.msra.mxu0 0
        %1043 = vmatprep.subr.bf16.mxu0 0
        %1044 = vmatpush1.bf16.msra.mxu0 0
        %1045 = vmatprep.subr.bf16.mxu0 0
        %1046 = vmatpush1.bf16.msra.mxu0 0
        %1047 = vmatprep.subr.bf16.mxu0 0
        %1048 = vmatpush1.bf16.msra.mxu0 %v1031
        %1049 = vmatprep.subr.bf16.mxu0 0
        %1050 = vmatpush2.bf16.msra.mxu0 0
        %1051 = vmatprep.subr.bf16.mxu0 0
        %1052 = vmatpush2.bf16.msra.mxu0 0
        %1053 = vmatprep.subr.bf16.mxu0 0
        %1054 = vmatpush2.bf16.msra.mxu0 0
        %1055 = vmatprep.subr.bf16.mxu0 0
        %1056 = vmatpush2.bf16.msra.mxu0 0
        %1057 = vmatprep.subr.bf16.mxu0 0
        %1058 = vmatpush2.bf16.msra.mxu0 0
        %1059 = vmatprep.subr.bf16.mxu0 0
        %1060 = vmatpush2.bf16.msra.mxu0 0
        %1061 = vmatprep.subr.bf16.mxu0 0
        %1062 = vmatpush2.bf16.msra.mxu0 0
        %1063 = vmatprep.subr.bf16.mxu0 0
        %1064 = vmatpush2.bf16.msra.mxu0 0
        %1065 = vmatprep.mubr.bf16.mxu0 0
        %1066 = vmatmul.mubr.bf16.gmra.mxu0 %v1027
        %v1067 = vpop.f32.mrf.mxu0
        %v1068 = vadd.f32 0.0, %v1067
        %v1069 = vpop.f32.mrf.mxu0
        %v1070 = vpop.f32.mrf.mxu0
        %v1071 = vpop.f32.mrf.mxu0
        %1072 = vdwg.mxu0
        %v1073 = vpack.c.bf16 %v1068, %v1068
        %1075 = vrot.lane.b32.xlu0 %v955, 96
        %v1076 = vpop.permute.xlu0 %1075
        %1078 = vrot.lane.b32.xlu0 %v956, 96
        %v1079 = vpop.permute.xlu0 %1078
        %v1081 = vsel %vm966, %v1076, 0
        %v1084 = vsel %vm966, %v1079, 0
        %1086 = vmatprep.subr.bf16.mxu0 0
        %1087 = vmatpush1.bf16.xpose.msra.mxu0 0
        %1088 = vmatprep.subr.bf16.mxu0 0
        %1089 = vmatpush1.bf16.xpose.msra.mxu0 0
        %1090 = vmatprep.subr.bf16.mxu0 0
        %1091 = vmatpush1.bf16.xpose.msra.mxu0 0
        %1092 = vmatprep.subr.bf16.mxu0 0
        %1093 = vmatpush1.bf16.xpose.msra.mxu0 0
        %1094 = vmatprep.subr.bf16.mxu0 0
        %1095 = vmatpush1.bf16.xpose.msra.mxu0 0
        %1096 = vmatprep.subr.bf16.mxu0 0
        %1097 = vmatpush1.bf16.xpose.msra.mxu0 0
        %1098 = vmatprep.subr.bf16.mxu0 0
        %1099 = vmatpush1.bf16.xpose.msra.mxu0 0
        %1100 = vmatprep.subr.bf16.mxu0 0
        %1101 = vmatpush1.bf16.xpose.msra.mxu0 %v1084
        %1102 = vmatprep.subr.bf16.mxu0 0
        %1103 = vmatpush2.bf16.xpose.msra.mxu0 0
        %1104 = vmatprep.subr.bf16.mxu0 0
        %1105 = vmatpush2.bf16.xpose.msra.mxu0 0
        %1106 = vmatprep.subr.bf16.mxu0 0
        %1107 = vmatpush2.bf16.xpose.msra.mxu0 0
        %1108 = vmatprep.subr.bf16.mxu0 0
        %1109 = vmatpush2.bf16.xpose.msra.mxu0 0
        %1110 = vmatprep.subr.bf16.mxu0 0
        %1111 = vmatpush2.bf16.xpose.msra.mxu0 0
        %1112 = vmatprep.subr.bf16.mxu0 0
        %1113 = vmatpush2.bf16.xpose.msra.mxu0 0
        %1114 = vmatprep.subr.bf16.mxu0 0
        %1115 = vmatpush2.bf16.xpose.msra.mxu0 0
        %1116 = vmatprep.subr.bf16.mxu0 0
        %1117 = vmatpush2.bf16.xpose.msra.mxu0 0
        %1118 = vmatprep.mubr.bf16.mxu0 0
        %1119 = vmatmul.mubr.bf16.gmra.mxu0 %v1081
        %v1120 = vpop.f32.mrf.mxu0
        %v1121 = vadd.f32 0.0, %v1120
        %v1122 = vpop.f32.mrf.mxu0
        %v1123 = vpop.f32.mrf.mxu0
        %v1124 = vpop.f32.mrf.mxu0
        %1125 = vdwg.mxu0
        %v1126 = vsel %vm1013, %v1121, -inf
        %1127 = vmax.xlane.f32.xlu0 %v1126
        %v1128 = vpop.xlane.xlu0 %1127
        %v1129 = vsub.f32 %v1121, %v1128
        %v1130 = vmul.f32 %v1129, 1.442695
        %v1131 = vpow.pop %v1130
        %v1132 = vsel %vm1013, %v1131, 0.0
        %1133 = vadd.xlane.f32.xlu0 %v1132
        %v1134 = vpop.xlane.xlu0 %1133
        %v1135 = vrcp.pop %v1134
        %v1136 = vmul.f32 %v1131, %v1135
        %v1137 = vpack.c.bf16 %v1136, %v1136
        %1139 = vrot.lane.b32.xlu0 %v957, 96
        %v1140 = vpop.permute.xlu0 %1139
        %v1142 = vsel %vm1013, %v1137, 0
        %v1145 = vsel %vm1029, %v1140, 0
        %1147 = vmatprep.subr.bf16.mxu0 0
        %1148 = vmatpush1.bf16.msra.mxu0 0
        %1149 = vmatprep.subr.bf16.mxu0 0
        %1150 = vmatpush1.bf16.msra.mxu0 0
        %1151 = vmatprep.subr.bf16.mxu0 0
        %1152 = vmatpush1.bf16.msra.mxu0 0
        %1153 = vmatprep.subr.bf16.mxu0 0
        %1154 = vmatpush1.bf16.msra.mxu0 0
        %1155 = vmatprep.subr.bf16.mxu0 0
        %1156 = vmatpush1.bf16.msra.mxu0 0
        %1157 = vmatprep.subr.bf16.mxu0 0
        %1158 = vmatpush1.bf16.msra.mxu0 0
        %1159 = vmatprep.subr.bf16.mxu0 0
        %1160 = vmatpush1.bf16.msra.mxu0 0
        %1161 = vmatprep.subr.bf16.mxu0 0
        %1162 = vmatpush1.bf16.msra.mxu0 %v1145
        %1163 = vmatprep.subr.bf16.mxu0 0
        %1164 = vmatpush2.bf16.msra.mxu0 0
        %1165 = vmatprep.subr.bf16.mxu0 0
        %1166 = vmatpush2.bf16.msra.mxu0 0
        %1167 = vmatprep.subr.bf16.mxu0 0
        %1168 = vmatpush2.bf16.msra.mxu0 0
        %1169 = vmatprep.subr.bf16.mxu0 0
        %1170 = vmatpush2.bf16.msra.mxu0 0
        %1171 = vmatprep.subr.bf16.mxu0 0
        %1172 = vmatpush2.bf16.msra.mxu0 0
        %1173 = vmatprep.subr.bf16.mxu0 0
        %1174 = vmatpush2.bf16.msra.mxu0 0
        %1175 = vmatprep.subr.bf16.mxu0 0
        %1176 = vmatpush2.bf16.msra.mxu0 0
        %1177 = vmatprep.subr.bf16.mxu0 0
        %1178 = vmatpush2.bf16.msra.mxu0 0
        %1179 = vmatprep.mubr.bf16.mxu0 0
        %1180 = vmatmul.mubr.bf16.gmra.mxu0 %v1142
        %v1181 = vpop.f32.mrf.mxu0
        %v1182 = vadd.f32 0.0, %v1181
        %v1183 = vpop.f32.mrf.mxu0
        %v1184 = vpop.f32.mrf.mxu0
        %v1185 = vpop.f32.mrf.mxu0
        %1186 = vdwg.mxu0
        %v1187 = vpack.c.bf16 %v1182, %v1182
        %v1189 = vsel %vm966, %v1187, 0
        %1191 = vmatprep.subr.bf16.mxu0 0
        %1192 = vmatpush1.bf16.msra.mxu0 0
        %1193 = vmatprep.subr.bf16.mxu0 0
        %1194 = vmatpush1.bf16.msra.mxu0 0
        %1195 = vmatprep.subr.bf16.mxu0 0
        %1196 = vmatpush1.bf16.msra.mxu0 0
        %1197 = vmatprep.subr.bf16.mxu0 0
        %1198 = vmatpush1.bf16.msra.mxu0 0
        %1199 = vmatprep.subr.bf16.mxu0 0
        %1200 = vmatpush1.bf16.msra.mxu0 0
        %1201 = vmatprep.subr.bf16.mxu0 0
        %1202 = vmatpush1.bf16.msra.mxu0 0
        %1203 = vmatprep.subr.bf16.mxu0 0
        %1204 = vmatpush1.bf16.msra.mxu0 %v961
        %1205 = vmatprep.subr.bf16.mxu0 0
        %1206 = vmatpush1.bf16.msra.mxu0 %v960
        %1207 = vmatprep.subr.bf16.mxu0 0
        %1208 = vmatpush2.bf16.msra.mxu0 0
        %1209 = vmatprep.subr.bf16.mxu0 0
        %1210 = vmatpush2.bf16.msra.mxu0 0
        %1211 = vmatprep.subr.bf16.mxu0 0
        %1212 = vmatpush2.bf16.msra.mxu0 0
        %1213 = vmatprep.subr.bf16.mxu0 0
        %1214 = vmatpush2.bf16.msra.mxu0 0
        %1215 = vmatprep.subr.bf16.mxu0 0
        %1216 = vmatpush2.bf16.msra.mxu0 0
        %1217 = vmatprep.subr.bf16.mxu0 0
        %1218 = vmatpush2.bf16.msra.mxu0 0
        %1219 = vmatprep.subr.bf16.mxu0 0
        %1220 = vmatpush2.bf16.msra.mxu0 0
        %1221 = vmatprep.subr.bf16.mxu0 0
        %1222 = vmatpush2.bf16.msra.mxu0 0
        %1223 = vmatprep.mubr.bf16.mxu0 0
        %1224 = vmatmul.mubr.bf16.gmra.mxu0 %v1189
        %v1225 = vpop.f32.mrf.mxu0
        %v1226 = vadd.f32 0.0, %v1225
        %v1227 = vpop.f32.mrf.mxu0
        %v1228 = vpop.f32.mrf.mxu0
        %v1229 = vpop.f32.mrf.mxu0
        %1230 = vdwg.mxu0
        %v1232 = vsel %vm966, %v1073, 0
        %1234 = vmatprep.subr.bf16.mxu0 0
        %1235 = vmatpush1.bf16.msra.mxu0 0
        %1236 = vmatprep.subr.bf16.mxu0 0
        %1237 = vmatpush1.bf16.msra.mxu0 0
        %1238 = vmatprep.subr.bf16.mxu0 0
        %1239 = vmatpush1.bf16.msra.mxu0 0
        %1240 = vmatprep.subr.bf16.mxu0 0
        %1241 = vmatpush1.bf16.msra.mxu0 0
        %1242 = vmatprep.subr.bf16.mxu0 0
        %1243 = vmatpush1.bf16.msra.mxu0 0
        %1244 = vmatprep.subr.bf16.mxu0 0
        %1245 = vmatpush1.bf16.msra.mxu0 0
        %1246 = vmatprep.subr.bf16.mxu0 0
        %1247 = vmatpush1.bf16.msra.mxu0 %v959
        %1248 = vmatprep.subr.bf16.mxu0 0
        %1249 = vmatpush1.bf16.msra.mxu0 %v958
        %1250 = vmatprep.subr.bf16.mxu0 0
        %1251 = vmatpush2.bf16.msra.mxu0 0
        %1252 = vmatprep.subr.bf16.mxu0 0
        %1253 = vmatpush2.bf16.msra.mxu0 0
        %1254 = vmatprep.subr.bf16.mxu0 0
        %1255 = vmatpush2.bf16.msra.mxu0 0
        %1256 = vmatprep.subr.bf16.mxu0 0
        %1257 = vmatpush2.bf16.msra.mxu0 0
        %1258 = vmatprep.subr.bf16.mxu0 0
        %1259 = vmatpush2.bf16.msra.mxu0 0
        %1260 = vmatprep.subr.bf16.mxu0 0
        %1261 = vmatpush2.bf16.msra.mxu0 0
        %1262 = vmatprep.subr.bf16.mxu0 0
        %1263 = vmatpush2.bf16.msra.mxu0 0
        %1264 = vmatprep.subr.bf16.mxu0 0
        %1265 = vmatpush2.bf16.msra.mxu0 0
        %1266 = vmatprep.mubr.bf16.mxu0 0
        %1267 = vmatmul.mubr.bf16.gmra.mxu0 %v1232
        %v1268 = vpop.f32.mrf.mxu0
        %v1269 = vadd.f32 %v1226, %v1268
        %v1270 = vpop.f32.mrf.mxu0
        %v1271 = vpop.f32.mrf.mxu0
        %v1272 = vpop.f32.mrf.mxu0
        %1273 = vdwg.mxu0
        %1274 = vrot.lane.b32.xlu0 %v955, 64
        %v1275 = vpop.permute.xlu0 %1274
        %1276 = vrot.lane.b32.xlu0 %v956, 64
        %v1277 = vpop.permute.xlu0 %1276
        %v1279 = vsel %vm966, %v1275, 0
        %v1282 = vsel %vm966, %v1277, 0
        %1284 = vmatprep.subr.bf16.mxu0 0
        %1285 = vmatpush1.bf16.xpose.msra.mxu0 0
        %1286 = vmatprep.subr.bf16.mxu0 0
        %1287 = vmatpush1.bf16.xpose.msra.mxu0 0
        %1288 = vmatprep.subr.bf16.mxu0 0
        %1289 = vmatpush1.bf16.xpose.msra.mxu0 0
        %1290 = vmatprep.subr.bf16.mxu0 0
        %1291 = vmatpush1.bf16.xpose.msra.mxu0 0
        %1292 = vmatprep.subr.bf16.mxu0 0
        %1293 = vmatpush1.bf16.xpose.msra.mxu0 0
        %1294 = vmatprep.subr.bf16.mxu0 0
        %1295 = vmatpush1.bf16.xpose.msra.mxu0 0
        %1296 = vmatprep.subr.bf16.mxu0 0
        %1297 = vmatpush1.bf16.xpose.msra.mxu0 0
        %1298 = vmatprep.subr.bf16.mxu0 0
        %1299 = vmatpush1.bf16.xpose.msra.mxu0 %v1282
        %1300 = vmatprep.subr.bf16.mxu0 0
        %1301 = vmatpush2.bf16.xpose.msra.mxu0 0
        %1302 = vmatprep.subr.bf16.mxu0 0
        %1303 = vmatpush2.bf16.xpose.msra.mxu0 0
        %1304 = vmatprep.subr.bf16.mxu0 0
        %1305 = vmatpush2.bf16.xpose.msra.mxu0 0
        %1306 = vmatprep.subr.bf16.mxu0 0
        %1307 = vmatpush2.bf16.xpose.msra.mxu0 0
        %1308 = vmatprep.subr.bf16.mxu0 0
        %1309 = vmatpush2.bf16.xpose.msra.mxu0 0
        %1310 = vmatprep.subr.bf16.mxu0 0
        %1311 = vmatpush2.bf16.xpose.msra.mxu0 0
        %1312 = vmatprep.subr.bf16.mxu0 0
        %1313 = vmatpush2.bf16.xpose.msra.mxu0 0
        %1314 = vmatprep.subr.bf16.mxu0 0
        %1315 = vmatpush2.bf16.xpose.msra.mxu0 0
        %1316 = vmatprep.mubr.bf16.mxu0 0
        %1317 = vmatmul.mubr.bf16.gmra.mxu0 %v1279
        %v1318 = vpop.f32.mrf.mxu0
        %v1319 = vadd.f32 0.0, %v1318
        %v1320 = vpop.f32.mrf.mxu0
        %v1321 = vpop.f32.mrf.mxu0
        %v1322 = vpop.f32.mrf.mxu0
        %1323 = vdwg.mxu0
        %v1324 = vsel %vm1013, %v1319, -inf
        %1325 = vmax.xlane.f32.xlu0 %v1324
        %v1326 = vpop.xlane.xlu0 %1325
        %v1327 = vsub.f32 %v1319, %v1326
        %v1328 = vmul.f32 %v1327, 1.442695
        %v1329 = vpow.pop %v1328
        %v1330 = vsel %vm1013, %v1329, 0.0
        %1331 = vadd.xlane.f32.xlu0 %v1330
        %v1332 = vpop.xlane.xlu0 %1331
        %v1333 = vrcp.pop %v1332
        %v1334 = vmul.f32 %v1329, %v1333
        %v1335 = vpack.c.bf16 %v1334, %v1334
        %1336 = vrot.lane.b32.xlu0 %v957, 64
        %v1337 = vpop.permute.xlu0 %1336
        %v1339 = vsel %vm1013, %v1335, 0
        %v1342 = vsel %vm1029, %v1337, 0
        %1344 = vmatprep.subr.bf16.mxu0 0
        %1345 = vmatpush1.bf16.msra.mxu0 0
        %1346 = vmatprep.subr.bf16.mxu0 0
        %1347 = vmatpush1.bf16.msra.mxu0 0
        %1348 = vmatprep.subr.bf16.mxu0 0
        %1349 = vmatpush1.bf16.msra.mxu0 0
        %1350 = vmatprep.subr.bf16.mxu0 0
        %1351 = vmatpush1.bf16.msra.mxu0 0
        %1352 = vmatprep.subr.bf16.mxu0 0
        %1353 = vmatpush1.bf16.msra.mxu0 0
        %1354 = vmatprep.subr.bf16.mxu0 0
        %1355 = vmatpush1.bf16.msra.mxu0 0
        %1356 = vmatprep.subr.bf16.mxu0 0
        %1357 = vmatpush1.bf16.msra.mxu0 0
        %1358 = vmatprep.subr.bf16.mxu0 0
        %1359 = vmatpush1.bf16.msra.mxu0 %v1342
        %1360 = vmatprep.subr.bf16.mxu0 0
        %1361 = vmatpush2.bf16.msra.mxu0 0
        %1362 = vmatprep.subr.bf16.mxu0 0
        %1363 = vmatpush2.bf16.msra.mxu0 0
        %1364 = vmatprep.subr.bf16.mxu0 0
        %1365 = vmatpush2.bf16.msra.mxu0 0
        %1366 = vmatprep.subr.bf16.mxu0 0
        %1367 = vmatpush2.bf16.msra.mxu0 0
        %1368 = vmatprep.subr.bf16.mxu0 0
        %1369 = vmatpush2.bf16.msra.mxu0 0
        %1370 = vmatprep.subr.bf16.mxu0 0
        %1371 = vmatpush2.bf16.msra.mxu0 0
        %1372 = vmatprep.subr.bf16.mxu0 0
        %1373 = vmatpush2.bf16.msra.mxu0 0
        %1374 = vmatprep.subr.bf16.mxu0 0
        %1375 = vmatpush2.bf16.msra.mxu0 0
        %1376 = vmatprep.mubr.bf16.mxu0 0
        %1377 = vmatmul.mubr.bf16.gmra.mxu0 %v1339
        %v1378 = vpop.f32.mrf.mxu0
        %v1379 = vadd.f32 0.0, %v1378
        %v1380 = vpop.f32.mrf.mxu0
        %v1381 = vpop.f32.mrf.mxu0
        %v1382 = vpop.f32.mrf.mxu0
        %1383 = vdwg.mxu0
        %v1384 = vpack.c.bf16 %v1379, %v1379
        %v1386 = vsel %vm966, %v1384, 0
        %1388 = vmatprep.subr.bf16.mxu0 0
        %1389 = vmatpush1.bf16.msra.mxu0 0
        %1390 = vmatprep.subr.bf16.mxu0 0
        %1391 = vmatpush1.bf16.msra.mxu0 0
        %1392 = vmatprep.subr.bf16.mxu0 0
        %1393 = vmatpush1.bf16.msra.mxu0 0
        %1394 = vmatprep.subr.bf16.mxu0 0
        %1395 = vmatpush1.bf16.msra.mxu0 0
        %1396 = vmatprep.subr.bf16.mxu0 0
        %1397 = vmatpush1.bf16.msra.mxu0 0
        %1398 = vmatprep.subr.bf16.mxu0 0
        %1399 = vmatpush1.bf16.msra.mxu0 0
        %1400 = vmatprep.subr.bf16.mxu0 0
        %1401 = vmatpush1.bf16.msra.mxu0 %v963
        %1402 = vmatprep.subr.bf16.mxu0 0
        %1403 = vmatpush1.bf16.msra.mxu0 %v962
        %1404 = vmatprep.subr.bf16.mxu0 0
        %1405 = vmatpush2.bf16.msra.mxu0 0
        %1406 = vmatprep.subr.bf16.mxu0 0
        %1407 = vmatpush2.bf16.msra.mxu0 0
        %1408 = vmatprep.subr.bf16.mxu0 0
        %1409 = vmatpush2.bf16.msra.mxu0 0
        %1410 = vmatprep.subr.bf16.mxu0 0
        %1411 = vmatpush2.bf16.msra.mxu0 0
        %1412 = vmatprep.subr.bf16.mxu0 0
        %1413 = vmatpush2.bf16.msra.mxu0 0
        %1414 = vmatprep.subr.bf16.mxu0 0
        %1415 = vmatpush2.bf16.msra.mxu0 0
        %1416 = vmatprep.subr.bf16.mxu0 0
        %1417 = vmatpush2.bf16.msra.mxu0 0
        %1418 = vmatprep.subr.bf16.mxu0 0
        %1419 = vmatpush2.bf16.msra.mxu0 0
        %1420 = vmatprep.mubr.bf16.mxu0 0
        %1421 = vmatmul.mubr.bf16.gmra.mxu0 %v1386
        %v1422 = vpop.f32.mrf.mxu0
        %v1423 = vadd.f32 0.0, %v1422
        %v1424 = vpop.f32.mrf.mxu0
        %v1425 = vpop.f32.mrf.mxu0
        %v1426 = vpop.f32.mrf.mxu0
        %1427 = vdwg.mxu0
        %v1428 = vadd.f32 %v1269, %v1423
        %1429 = vrot.lane.b32.xlu0 %v955, 32
        %v1430 = vpop.permute.xlu0 %1429
        %1431 = vrot.lane.b32.xlu0 %v956, 32
        %v1432 = vpop.permute.xlu0 %1431
        %v1434 = vsel %vm966, %v1430, 0
        %v1437 = vsel %vm966, %v1432, 0
        %1439 = vmatprep.subr.bf16.mxu0 0
        %1440 = vmatpush1.bf16.xpose.msra.mxu0 0
        %1441 = vmatprep.subr.bf16.mxu0 0
        %1442 = vmatpush1.bf16.xpose.msra.mxu0 0
        %1443 = vmatprep.subr.bf16.mxu0 0
        %1444 = vmatpush1.bf16.xpose.msra.mxu0 0
        %1445 = vmatprep.subr.bf16.mxu0 0
        %1446 = vmatpush1.bf16.xpose.msra.mxu0 0
        %1447 = vmatprep.subr.bf16.mxu0 0
        %1448 = vmatpush1.bf16.xpose.msra.mxu0 0
        %1449 = vmatprep.subr.bf16.mxu0 0
        %1450 = vmatpush1.bf16.xpose.msra.mxu0 0
        %1451 = vmatprep.subr.bf16.mxu0 0
        %1452 = vmatpush1.bf16.xpose.msra.mxu0 0
        %1453 = vmatprep.subr.bf16.mxu0 0
        %1454 = vmatpush1.bf16.xpose.msra.mxu0 %v1437
        %1455 = vmatprep.subr.bf16.mxu0 0
        %1456 = vmatpush2.bf16.xpose.msra.mxu0 0
        %1457 = vmatprep.subr.bf16.mxu0 0
        %1458 = vmatpush2.bf16.xpose.msra.mxu0 0
        %1459 = vmatprep.subr.bf16.mxu0 0
        %1460 = vmatpush2.bf16.xpose.msra.mxu0 0
        %1461 = vmatprep.subr.bf16.mxu0 0
        %1462 = vmatpush2.bf16.xpose.msra.mxu0 0
        %1463 = vmatprep.subr.bf16.mxu0 0
        %1464 = vmatpush2.bf16.xpose.msra.mxu0 0
        %1465 = vmatprep.subr.bf16.mxu0 0
        %1466 = vmatpush2.bf16.xpose.msra.mxu0 0
        %1467 = vmatprep.subr.bf16.mxu0 0
        %1468 = vmatpush2.bf16.xpose.msra.mxu0 0
        %1469 = vmatprep.subr.bf16.mxu0 0
        %1470 = vmatpush2.bf16.xpose.msra.mxu0 0
        %1471 = vmatprep.mubr.bf16.mxu0 0
        %1472 = vmatmul.mubr.bf16.gmra.mxu0 %v1434
        %v1473 = vpop.f32.mrf.mxu0
        %v1474 = vadd.f32 0.0, %v1473
        %v1475 = vpop.f32.mrf.mxu0
        %v1476 = vpop.f32.mrf.mxu0
        %v1477 = vpop.f32.mrf.mxu0
        %1478 = vdwg.mxu0
        %v1479 = vsel %vm1013, %v1474, -inf
        %1480 = vmax.xlane.f32.xlu0 %v1479
        %v1481 = vpop.xlane.xlu0 %1480
        %v1482 = vsub.f32 %v1474, %v1481
        %v1483 = vmul.f32 %v1482, 1.442695
        %v1484 = vpow.pop %v1483
        %v1485 = vsel %vm1013, %v1484, 0.0
        %1486 = vadd.xlane.f32.xlu0 %v1485
        %v1487 = vpop.xlane.xlu0 %1486
        %v1488 = vrcp.pop %v1487
        %v1489 = vmul.f32 %v1484, %v1488
        %v1490 = vpack.c.bf16 %v1489, %v1489
        %1491 = vrot.lane.b32.xlu0 %v957, 32
        %v1492 = vpop.permute.xlu0 %1491
        %v1494 = vsel %vm1013, %v1490, 0
        %v1497 = vsel %vm1029, %v1492, 0
        %1499 = vmatprep.subr.bf16.mxu0 0
        %1500 = vmatpush1.bf16.msra.mxu0 0
        %1501 = vmatprep.subr.bf16.mxu0 0
        %1502 = vmatpush1.bf16.msra.mxu0 0
        %1503 = vmatprep.subr.bf16.mxu0 0
        %1504 = vmatpush1.bf16.msra.mxu0 0
        %1505 = vmatprep.subr.bf16.mxu0 0
        %1506 = vmatpush1.bf16.msra.mxu0 0
        %1507 = vmatprep.subr.bf16.mxu0 0
        %1508 = vmatpush1.bf16.msra.mxu0 0
        %1509 = vmatprep.subr.bf16.mxu0 0
        %1510 = vmatpush1.bf16.msra.mxu0 0
        %1511 = vmatprep.subr.bf16.mxu0 0
        %1512 = vmatpush1.bf16.msra.mxu0 0
        %1513 = vmatprep.subr.bf16.mxu0 0
        %1514 = vmatpush1.bf16.msra.mxu0 %v1497
        %1515 = vmatprep.subr.bf16.mxu0 0
        %1516 = vmatpush2.bf16.msra.mxu0 0
        %1517 = vmatprep.subr.bf16.mxu0 0
        %1518 = vmatpush2.bf16.msra.mxu0 0
        %1519 = vmatprep.subr.bf16.mxu0 0
        %1520 = vmatpush2.bf16.msra.mxu0 0
        %1521 = vmatprep.subr.bf16.mxu0 0
        %1522 = vmatpush2.bf16.msra.mxu0 0
        %1523 = vmatprep.subr.bf16.mxu0 0
        %1524 = vmatpush2.bf16.msra.mxu0 0
        %1525 = vmatprep.subr.bf16.mxu0 0
        %1526 = vmatpush2.bf16.msra.mxu0 0
        %1527 = vmatprep.subr.bf16.mxu0 0
        %1528 = vmatpush2.bf16.msra.mxu0 0
        %1529 = vmatprep.subr.bf16.mxu0 0
        %1530 = vmatpush2.bf16.msra.mxu0 0
        %1531 = vmatprep.mubr.bf16.mxu0 0
        %1532 = vmatmul.mubr.bf16.gmra.mxu0 %v1494
        %v1533 = vpop.f32.mrf.mxu0
        %v1534 = vadd.f32 0.0, %v1533
        %v1535 = vpop.f32.mrf.mxu0
        %v1536 = vpop.f32.mrf.mxu0
        %v1537 = vpop.f32.mrf.mxu0
        %1538 = vdwg.mxu0
        %v1539 = vpack.c.bf16 %v1534, %v1534
        %v1541 = vsel %vm966, %v1539, 0
        %1543 = vmatprep.subr.bf16.mxu0 0
        %1544 = vmatpush1.bf16.msra.mxu0 0
        %1545 = vmatprep.subr.bf16.mxu0 0
        %1546 = vmatpush1.bf16.msra.mxu0 0
        %1547 = vmatprep.subr.bf16.mxu0 0
        %1548 = vmatpush1.bf16.msra.mxu0 0
        %1549 = vmatprep.subr.bf16.mxu0 0
        %1550 = vmatpush1.bf16.msra.mxu0 0
        %1551 = vmatprep.subr.bf16.mxu0 0
        %1552 = vmatpush1.bf16.msra.mxu0 0
        %1553 = vmatprep.subr.bf16.mxu0 0
        %1554 = vmatpush1.bf16.msra.mxu0 0
        %1555 = vmatprep.subr.bf16.mxu0 0
        %1556 = vmatpush1.bf16.msra.mxu0 %v965
        %1557 = vmatprep.subr.bf16.mxu0 0
        %1558 = vmatpush1.bf16.msra.mxu0 %v964
        %1559 = vmatprep.subr.bf16.mxu0 0
        %1560 = vmatpush2.bf16.msra.mxu0 0
        %1561 = vmatprep.subr.bf16.mxu0 0
        %1562 = vmatpush2.bf16.msra.mxu0 0
        %1563 = vmatprep.subr.bf16.mxu0 0
        %1564 = vmatpush2.bf16.msra.mxu0 0
        %1565 = vmatprep.subr.bf16.mxu0 0
        %1566 = vmatpush2.bf16.msra.mxu0 0
        %1567 = vmatprep.subr.bf16.mxu0 0
        %1568 = vmatpush2.bf16.msra.mxu0 0
        %1569 = vmatprep.subr.bf16.mxu0 0
        %1570 = vmatpush2.bf16.msra.mxu0 0
        %1571 = vmatprep.subr.bf16.mxu0 0
        %1572 = vmatpush2.bf16.msra.mxu0 0
        %1573 = vmatprep.subr.bf16.mxu0 0
        %1574 = vmatpush2.bf16.msra.mxu0 0
        %1575 = vmatprep.mubr.bf16.mxu0 0
        %1576 = vmatmul.mubr.bf16.gmra.mxu0 %v1541
        %v1577 = vpop.f32.mrf.mxu0
        %v1578 = vadd.f32 0.0, %v1577
        %v1579 = vpop.f32.mrf.mxu0
        %v1580 = vpop.f32.mrf.mxu0
        %v1581 = vpop.f32.mrf.mxu0
        %1582 = vdwg.mxu0
        %v1583 = vadd.f32 %v1428, %v1578
        %v1585 = vlaneseq
        %v1586 = vshrl.u32 %v1585, 7
        %v1587 = vsub.s32 0, %v1586
        %v1588 = vrot.slane %v719, %v1587
        %v1590 = vadd.f32 %v1583, %v1588
        %v1591 = vadd.f32 %v790, %v1590
        %1592 = vadd.xlane.f32.xlu0 %v1591
        %v1593 = vpop.xlane.xlu0 %1592
        %v1594 = vrcp.pop 128.0
        %v1595 = vmul.f32 %v1593, %v1594
        %v1596 = vsub.f32 %v1591, %v1595
        %v1597 = vmul.f32 %v1596, %v1596
        %1598 = vadd.xlane.f32.xlu0 %v1597
        %v1599 = vpop.xlane.xlu0 %1598
        %v1600 = vmul.f32 %v1599, %v1594
        %v1601 = vadd.f32 %v1600, 1e-05
        %v1602 = vrsqrt.pop %v1601
        %v1603 = vmul.f32 %v1596, %v1602
        %v1605 = vlaneseq
        %v1606 = vshrl.u32 %v1605, 7
        %v1607 = vsub.s32 0, %v1606
        %v1608 = vrot.slane %v720, %v1607
        %v1610 = vmul.f32 %v1603, %v1608
        %v1612 = vlaneseq
        %v1613 = vshrl.u32 %v1612, 7
        %v1614 = vsub.s32 0, %v1613
        %v1615 = vrot.slane %v721, %v1614
        %v1617 = vadd.f32 %v1610, %v1615
        %v1618 = vpack.c.bf16 %v1617, %v1617
        %v1619 = vpack.c.bf16 %v724, %v722
        %v1620 = vpack.c.bf16 %v725, %v723
        %v1621 = vpack.c.bf16 %v728, %v726
        %v1622 = vpack.c.bf16 %v729, %v727
        %v1623 = vpack.c.bf16 %v732, %v730
        %v1624 = vpack.c.bf16 %v733, %v731
        %v1625 = vpack.c.bf16 %v736, %v734
        %v1626 = vpack.c.bf16 %v737, %v735
        %v1627 = vpack.c.bf16 %v740, %v738
        %v1628 = vpack.c.bf16 %v741, %v739
        %v1629 = vpack.c.bf16 %v744, %v742
        %v1630 = vpack.c.bf16 %v745, %v743
        %v1631 = vpack.c.bf16 %v748, %v746
        %v1632 = vpack.c.bf16 %v749, %v747
        %v1633 = vpack.c.bf16 %v752, %v750
        %v1634 = vpack.c.bf16 %v753, %v751
        %v1636 = vlaneseq
        %v1637 = vshrl.u32 %v1636, 7
        %v1638 = vsub.s32 0, %v1637
        %v1639 = vrot.slane %v754, %v1638
        %v1640 = vlaneseq
        %v1641 = vshrl.u32 %v1640, 7
        %v1642 = vsub.s32 1, %v1641
        %v1643 = vrot.slane %v754, %v1642
        %1646 = vmatprep.subr.bf16.mxu0 %v1634
        %1647 = vmatpush1.bf16.msra.mxu0 %v1633
        %1648 = vmatprep.subr.bf16.mxu0 %v1632
        %1649 = vmatpush1.bf16.msra.mxu0 %v1631
        %1650 = vmatprep.subr.bf16.mxu0 %v1630
        %1651 = vmatpush1.bf16.msra.mxu0 %v1629
        %1652 = vmatprep.subr.bf16.mxu0 %v1628
        %1653 = vmatpush1.bf16.msra.mxu0 %v1627
        %1654 = vmatprep.subr.bf16.mxu0 %v1626
        %1655 = vmatpush1.bf16.msra.mxu0 %v1625
        %1656 = vmatprep.subr.bf16.mxu0 %v1624
        %1657 = vmatpush1.bf16.msra.mxu0 %v1623
        %1658 = vmatprep.subr.bf16.mxu0 %v1622
        %1659 = vmatpush1.bf16.msra.mxu0 %v1621
        %1660 = vmatprep.subr.bf16.mxu0 %v1620
        %1661 = vmatpush1.bf16.msra.mxu0 %v1619
        %1662 = vmatprep.subr.bf16.mxu0 0
        %1663 = vmatpush2.bf16.msra.mxu0 0
        %1664 = vmatprep.subr.bf16.mxu0 0
        %1665 = vmatpush2.bf16.msra.mxu0 0
        %1666 = vmatprep.subr.bf16.mxu0 0
        %1667 = vmatpush2.bf16.msra.mxu0 0
        %1668 = vmatprep.subr.bf16.mxu0 0
        %1669 = vmatpush2.bf16.msra.mxu0 0
        %1670 = vmatprep.subr.bf16.mxu0 0
        %1671 = vmatpush2.bf16.msra.mxu0 0
        %1672 = vmatprep.subr.bf16.mxu0 0
        %1673 = vmatpush2.bf16.msra.mxu0 0
        %1674 = vmatprep.subr.bf16.mxu0 0
        %1675 = vmatpush2.bf16.msra.mxu0 0
        %1676 = vmatprep.subr.bf16.mxu0 0
        %1677 = vmatpush2.bf16.msra.mxu0 0
        %1678 = vmatprep.mubr.bf16.mxu0 0
        %1679 = vmatmul.mubr.bf16.gmra.mxu0 %v1618
        %v1680 = vpop.f32.mrf.mxu0
        %v1681 = vadd.f32 %v1639, %v1680
        %v1682 = vpop.f32.mrf.mxu0
        %v1683 = vadd.f32 %v1643, %v1682
        %v1684 = vpop.f32.mrf.mxu0
        %v1685 = vpop.f32.mrf.mxu0
        %1686 = vdwg.mxu0
        %v1687 = vmax.f32 %v1681, 0.0
        %v1688 = vmax.f32 %v1683, 0.0
        %v1689 = vpack.c.bf16 %v1687, %v1687
        %v1690 = vpack.c.bf16 %v1688, %v1688
        %v1691 = vpack.c.bf16 %v756, %v755
        %v1692 = vpack.c.bf16 %v758, %v757
        %v1693 = vpack.c.bf16 %v760, %v759
        %v1694 = vpack.c.bf16 %v762, %v761
        %v1695 = vpack.c.bf16 %v764, %v763
        %v1696 = vpack.c.bf16 %v766, %v765
        %v1697 = vpack.c.bf16 %v768, %v767
        %v1698 = vpack.c.bf16 %v770, %v769
        %v1699 = vpack.c.bf16 %v772, %v771
        %v1700 = vpack.c.bf16 %v774, %v773
        %v1701 = vpack.c.bf16 %v776, %v775
        %v1702 = vpack.c.bf16 %v778, %v777
        %v1703 = vpack.c.bf16 %v780, %v779
        %v1704 = vpack.c.bf16 %v782, %v781
        %v1705 = vpack.c.bf16 %v784, %v783
        %v1706 = vpack.c.bf16 %v786, %v785
        %v1708 = vlaneseq
        %v1709 = vshrl.u32 %v1708, 7
        %v1710 = vsub.s32 0, %v1709
        %v1711 = vrot.slane %v787, %v1710
        %1713 = vmatprep.subr.bf16.mxu0 0
        %1714 = vmatpush1.bf16.msra.mxu0 %v1698
        %1715 = vmatprep.subr.bf16.mxu0 0
        %1716 = vmatpush1.bf16.msra.mxu0 %v1697
        %1717 = vmatprep.subr.bf16.mxu0 0
        %1718 = vmatpush1.bf16.msra.mxu0 %v1696
        %1719 = vmatprep.subr.bf16.mxu0 0
        %1720 = vmatpush1.bf16.msra.mxu0 %v1695
        %1721 = vmatprep.subr.bf16.mxu0 0
        %1722 = vmatpush1.bf16.msra.mxu0 %v1694
        %1723 = vmatprep.subr.bf16.mxu0 0
        %1724 = vmatpush1.bf16.msra.mxu0 %v1693
        %1725 = vmatprep.subr.bf16.mxu0 0
        %1726 = vmatpush1.bf16.msra.mxu0 %v1692
        %1727 = vmatprep.subr.bf16.mxu0 0
        %1728 = vmatpush1.bf16.msra.mxu0 %v1691
        %1729 = vmatprep.subr.bf16.mxu0 0
        %1730 = vmatpush2.bf16.msra.mxu0 %v1706
        %1731 = vmatprep.subr.bf16.mxu0 0
        %1732 = vmatpush2.bf16.msra.mxu0 %v1705
        %1733 = vmatprep.subr.bf16.mxu0 0
        %1734 = vmatpush2.bf16.msra.mxu0 %v1704
        %1735 = vmatprep.subr.bf16.mxu0 0
        %1736 = vmatpush2.bf16.msra.mxu0 %v1703
        %1737 = vmatprep.subr.bf16.mxu0 0
        %1738 = vmatpush2.bf16.msra.mxu0 %v1702
        %1739 = vmatprep.subr.bf16.mxu0 0
        %1740 = vmatpush2.bf16.msra.mxu0 %v1701
        %1741 = vmatprep.subr.bf16.mxu0 0
        %1742 = vmatpush2.bf16.msra.mxu0 %v1700
        %1743 = vmatprep.subr.bf16.mxu0 0
        %1744 = vmatpush2.bf16.msra.mxu0 %v1699
        %1745 = vmatprep.mubr.bf16.mxu0 %v1690
        %1746 = vmatmul.mubr.bf16.gmra.mxu0 %v1689
        %v1747 = vpop.f32.mrf.mxu0
        %v1748 = vadd.f32 %v1711, %v1747
        %v1749 = vpop.f32.mrf.mxu0
        %v1750 = vpop.f32.mrf.mxu0
        %v1751 = vpop.f32.mrf.mxu0
        %1752 = vdwg.mxu0
        %v1753 = vadd.f32 %v1617, %v1748
        %1754 = vadd.xlane.f32.xlu0 %v1753
        %v1755 = vpop.xlane.xlu0 %1754
        %v1756 = vmul.f32 %v1755, %v1594
        %v1757 = vsub.f32 %v1753, %v1756
        %v1758 = vmul.f32 %v1757, %v1757
        %1759 = vadd.xlane.f32.xlu0 %v1758
        %v1760 = vpop.xlane.xlu0 %1759
        %v1761 = vmul.f32 %v1760, %v1594
        %v1762 = vadd.f32 %v1761, 1e-05
        %v1763 = vrsqrt.pop %v1762
        %v1764 = vmul.f32 %v1757, %v1763
        %v1766 = vlaneseq
        %v1767 = vshrl.u32 %v1766, 7
        %v1768 = vsub.s32 0, %v1767
        %v1769 = vrot.slane %v788, %v1768
        %v1771 = vmul.f32 %v1764, %v1769
        %v1773 = vlaneseq
        %v1774 = vshrl.u32 %v1773, 7
        %v1775 = vsub.s32 0, %v1774
        %v1776 = vrot.slane %v789, %v1775
        %v1778 = vadd.f32 %v1771, %v1776
        %1779 = vst [vmem:[%s650] sm:$0xff] %v1778
        %s1780 = sand.u32 %s407, 1
        %s1781 = scalar_lea.sflag [#allocation4], %s1780
        %s1782 = sand.u32 %s407, 1
        %s1783 = smul.addr %s1782, 8
        %s1784 = scalar_lea.vmem [#allocation14], %s1783
        // Predicated region
        $region117: #{tpu_custom_call.1} parent=87 // pred_check
          %p1785 = pneg %p417
        $region118: #{tpu_custom_call.1} parent=87 // pred_check_branch
          %1787 = sbr.rel (%p1785) target = $region120
        $region119: #{tpu_custom_call.1} parent=87 // pred_region
          %s1789 = ssub.s32 128, 128
          %1790 = vsyncadd %s1781, %s1789
          %s1791 = smul.addr %s37, 128
          %s1792 = scalar_lea.hbm %s17, %s1791
          %s1794 = sshll.u32 %s1784, 4
          %s1795 = int_to_ptr.vmem [resolvable:$true] %s1794
          %1797 = dma.vmem_to_hbm [thread:$0]  %s1795, 128, %s1792, %s1781
        $region120: #{tpu_custom_call.1} parent=87 // pred_fallthru
          _
      $region88: #{tpu_custom_call.1} parent=5 // pred_fallthru
        _
      %p1798 = scmp.le.s32.totalorder 2, %s32
      // Predicated region
      $region121: #{tpu_custom_call.1} parent=5 // pred_check
        %p1799 = pneg %p1798
      $region122: #{tpu_custom_call.1} parent=5 // pred_check_branch
        %1801 = sbr.rel (%p1799) target = $region124
      $region123: #{tpu_custom_call.1} parent=5 // pred_region
        %s1802 = ssub.s32 %s32, 2
        // Predicated region
        $region125: #{tpu_custom_call.1} parent=123 // pred_check
          %p1803 = pneg %p423
        $region126: #{tpu_custom_call.1} parent=123 // pred_check_branch
          %1805 = sbr.rel (%p1803) target = $region128
        $region127: #{tpu_custom_call.1} parent=123 // pred_region
          %s1806 = sand.u32 %s408, 1
          %s1807 = scalar_lea.sflag [#allocation4], %s1806
          %s1808 = sand.u32 %s408, 1
          %s1809 = smul.addr %s1808, 8
          %s1810 = scalar_lea.vmem [#allocation14], %s1809
          %1811 = dma.done %s1807, 128
        $region128: #{tpu_custom_call.1} parent=123 // pred_fallthru
          _
      $region124: #{tpu_custom_call.1} parent=5 // pred_fallthru
        _
    $region6: #{tpu_custom_call.1} parent=1 // loop_footer
      %s36 = sadd.s32 1, %s32
    $region7: #{tpu_custom_call.1} parent=1 // loop_footer_branch
      %31 = sbr.rel target = $region3
    $region8: #{tpu_custom_call.1} parent=1 // loop_exit
      _
    %1812 = vsyncpa [#allocation3], 1
    %s1813 = scalar_lea.sflag [#allocation3], 1
    %1814 = vsyncpa %s1813, 1
    %1815 = vsyncpa [#allocation6], 1
    %1816 = vsyncpa [#allocation9], 1
    %1817 = vsyncpa [#allocation12], 1
    %1818 = vsyncpa [#allocation4], 1
    %s1819 = scalar_lea.sflag [#allocation4], 1
    %1820 = vsyncpa %s1819, 1

</llo_original>
